<compile_context>
chip_gen: v7x
topology: tpu7x:2x2x1
jax: 0.10.0
libtpu: 0.0.40
codegen_flags: <defaults>
</compile_context>

<pallas_src>
import math

import jax
import jax.numpy as jnp
from jax.experimental import pallas as pl
from jax.experimental.pallas import tpu as pltpu


# ----------------------------------- math helper ---------------------------------------

def _gelu_tanh(x):
    # GELU(approximate='tanh'), computed in f32.
    c = math.sqrt(2.0 / math.pi)
    return 0.5 * x * (1.0 + jnp.tanh(c * (x + 0.044715 * x * x * x)))


# ------------------------------------- kernel ------------------------------------------

def _ffn_kernel(x_ref, w1_ref, b1_ref, w2_ref, b2_ref, o_ref, acc_ref):
    # Grid: (token tiles [parallel], hidden tiles [arbitrary / reduction]).
    # x_ref : (tm, C)   f32   token tile (resident across the k sweep)
    # w1_ref: (C, tk)   bf16  fc1 weight slice (pre-transposed, columns k*tk:(k+1)*tk)
    # b1_ref: (1, tk)   f32   fc1 bias slice
    # w2_ref: (tk, Co)  bf16  fc2 weight slice (pre-transposed, rows k*tk:(k+1)*tk)
    # b2_ref: (1, Co)   f32   fc2 bias
    # o_ref : (tm, Co)  out_dtype
    # acc_ref:(tm, Co)  f32   accumulator scratch
    k = pl.program_id(1)

    @pl.when(k == 0)
    def _():
        acc_ref[...] = jnp.zeros_like(acc_ref)

    x = x_ref[...].astype(jnp.bfloat16)                       # cast on VPU, in-kernel
    h = jnp.dot(x, w1_ref[...], preferred_element_type=jnp.float32) + b1_ref[...]
    h = _gelu_tanh(h)                                          # f32
    acc_ref[...] += jnp.dot(h.astype(jnp.bfloat16), w2_ref[...],
                            preferred_element_type=jnp.float32)

    @pl.when(k == pl.num_programs(1) - 1)
    def _():
        o_ref[...] = (acc_ref[...] + b2_ref[...]).astype(o_ref.dtype)


# ------------------------------------- wrapper -----------------------------------------

def ffn_pallas(x, w1_t, b1, w2_t, b2, *, tile_m=256, tile_k=512,
               out_dtype=jnp.bfloat16):
    """FFN forward. x: (..., C); w1_t: (C, Hf); w2_t: (Hf, Co). Returns (..., Co)."""
    lead_shape = x.shape[:-1]
    C = x.shape[-1]
    Hf = w1_t.shape[-1]
    Co = w2_t.shape[-1]

    x2 = x.reshape(-1, C)
    M = x2.shape[0]

    # ---- token-axis tiling (ragged last tile handled by a one-off zero pad) ----
    if M < tile_m:
        tile_m = max(8, ((M + 7) // 8) * 8)
    n_m = pl.cdiv(M, tile_m)
    Mp = n_m * tile_m
    if Mp != M:
        x2 = jnp.pad(x2, ((0, Mp - M), (0, 0)))     # padded rows discarded by out[:M]

    # ---- hidden-axis (reduction) tiling; prefer multiples of 256 for v6e/v7x MXU ----
    tk = min(tile_k, Hf)
    if Hf % tk != 0:
        # Zero-pad Hf: padded w1 cols / b1 entries give gelu(0)=0, padded w2 rows are 0,
        # so the padded slice contributes exactly 0 to the accumulator.
        Hp = pl.cdiv(Hf, tk) * tk
        w1_t = jnp.pad(w1_t, ((0, 0), (0, Hp - Hf)))
        b1 = jnp.pad(b1, ((0, Hp - Hf),))
        w2_t = jnp.pad(w2_t, ((0, Hp - Hf), (0, 0)))
        Hf = Hp
    n_k = Hf // tk

    w1_bf = w1_t.astype(jnp.bfloat16)
    w2_bf = w2_t.astype(jnp.bfloat16)
    b1_2d = b1.reshape(1, Hf).astype(jnp.float32)
    b2_2d = b2.reshape(1, Co).astype(jnp.float32)

    x_bytes = x2.dtype.itemsize
    out_bytes = jnp.dtype(out_dtype).itemsize

    # ---- VMEM budget: double-buffered blocks + f32 accumulator, with headroom ----
    est = (2 * tile_m * C * x_bytes        # x tile
           + 2 * C * tk * 2                # w1 slice (bf16)
           + 2 * tk * 4                    # b1 slice
           + 2 * tk * Co * 2               # w2 slice (bf16)
           + 2 * Co * 4                    # b2
           + 2 * tile_m * Co * out_bytes   # out tile
           + tile_m * Co * 4)              # acc scratch
    vmem_limit = min(max(int(est * 1.5) + (4 << 20), 32 << 20), 56 << 20)

    cost = pl.CostEstimate(
        flops=2 * M * C * Hf + 2 * M * Hf * Co,
        transcendentals=M * Hf,
        bytes_accessed=(M * C * x_bytes + C * Hf * 2 + Hf * Co * 2
                        + Hf * 4 + Co * 4 + M * Co * out_bytes),
    )

    out = pl.pallas_call(
        _ffn_kernel,
        out_shape=jax.ShapeDtypeStruct((Mp, Co), out_dtype),
        grid=(n_m, n_k),
        in_specs=[
            pl.BlockSpec((tile_m, C), lambda i, k: (i, 0)),   # x tile (resident over k)
            pl.BlockSpec((C, tk), lambda i, k: (0, k)),       # fc1 weight slice
            pl.BlockSpec((1, tk), lambda i, k: (0, k)),       # fc1 bias slice
            pl.BlockSpec((tk, Co), lambda i, k: (k, 0)),      # fc2 weight slice
            pl.BlockSpec((1, Co), lambda i, k: (0, 0)),       # fc2 bias (grid-invariant)
        ],
        out_specs=pl.BlockSpec((tile_m, Co), lambda i, k: (i, 0)),
        scratch_shapes=[pltpu.VMEM((tile_m, Co), jnp.float32)],
        compiler_params=pltpu.CompilerParams(
            dimension_semantics=("parallel", "arbitrary"),
            vmem_limit_bytes=vmem_limit),
        cost_estimate=cost,
    )(x2, w1_bf, b1_2d, w2_bf, b2_2d)

    return out[:M].reshape(*lead_shape, Co)


# ------------------------------------ references ---------------------------------------

def _ref_f32(x, w1_t, b1, w2_t, b2):
    return _gelu_tanh(x @ w1_t + b1) @ w2_t + b2


def _ref_bf16(x, w1_t, b1, w2_t, b2):
    # Same matmul numerics as the kernel: bf16 operands, f32 accumulation, f32 epilogue.
    h = jnp.dot(x.astype(jnp.bfloat16), w1_t.astype(jnp.bfloat16),
                preferred_element_type=jnp.float32) + b1
    h = _gelu_tanh(h)
    return jnp.dot(h.astype(jnp.bfloat16), w2_t.astype(jnp.bfloat16),
                   preferred_element_type=jnp.float32) + b2


# --------------------------------------- main ------------------------------------------

if __name__ == "__main__":
    # Small shapes consistent with the module: in_features=128, mlp_ratio=4.
    # L=160 makes M=320, exercising both the multi-tile token axis and the ragged pad.
    B, L, C = 2, 160, 128
    Hf = 4 * C                                     # hidden_features

    key = jax.random.PRNGKey(0)
    k1, k2, k3, k4, k5 = jax.random.split(key, 5)
    x = jax.random.normal(k1, (B, L, C), jnp.float32)
    # Weights stored pre-transposed as (in, out) so y = x @ W_t + b matches F.linear.
    w1_t = jax.random.normal(k2, (C, Hf), jnp.float32) * 0.02
    b1 = jax.random.normal(k3, (Hf,), jnp.float32) * 0.02
    w2_t = jax.random.normal(k4, (Hf, C), jnp.float32) * 0.02
    b2 = jax.random.normal(k5, (C,), jnp.float32) * 0.02

    # tile_k=256 -> two reduction steps over Hf=512 (exercises the accumulator path).
    out = jax.block_until_ready(
        ffn_pallas(x, w1_t, b1, w2_t, b2, tile_m=256, tile_k=256))
    out_f32 = out.astype(jnp.float32)

    ref_bf = jax.block_until_ready(_ref_bf16(x, w1_t, b1, w2_t, b2))
    ref_f32 = jax.block_until_ready(_ref_f32(x, w1_t, b1, w2_t, b2))

    err_bf = float(jnp.max(jnp.abs(out_f32 - ref_bf)))
    err_f32 = float(jnp.max(jnp.abs(out_f32 - ref_f32)))

    assert out.shape == (B, L, C), out.shape
    assert err_bf < 5e-3, f"mismatch vs bf16-matched reference: {err_bf}"
    assert err_f32 < 2e-2, f"mismatch vs f32 reference: {err_f32}"
    print("KERNEL_OK")
</pallas_src>

<mosaic_0001>
module attributes {stable_mosaic.version = 11 : i64} {
  func.func @_ffn_kernel(%arg0: i32, %arg1: i32, %arg2: memref<256x128xf32, #tpu.memory_space<vmem>>, %arg3: memref<128x256xbf16, #tpu.memory_space<vmem>>, %arg4: memref<1x256xf32, #tpu.memory_space<vmem>>, %arg5: memref<256x128xbf16, #tpu.memory_space<vmem>>, %arg6: memref<1x128xf32, #tpu.memory_space<vmem>>, %arg7: memref<256x128xbf16, #tpu.memory_space<vmem>>, %arg8: memref<256x128xf32, #tpu.memory_space<vmem>>) attributes {dimension_semantics = [#tpu.dimension_semantics<parallel>, #tpu.dimension_semantics<arbitrary>], iteration_bounds = array<i64: 2, 2>, scalar_prefetch = 0 : i64, scratch_operands = 1 : i64, tpu.core_type = #tpu.core_type<tc>, window_params = [{transform_indices = @transform_0, window_bounds = array<i64: 256, 128>}, {transform_indices = @transform_1, window_bounds = array<i64: 128, 256>}, {transform_indices = @transform_2, window_bounds = array<i64: 1, 256>}, {transform_indices = @transform_3, window_bounds = array<i64: 256, 128>}, {pipeline_mode = #tpu.pipeline_mode<synchronous>, transform_indices = @transform_4, window_bounds = array<i64: 1, 128>}, {transform_indices = @transform_5, window_bounds = array<i64: 256, 128>}]} {
    %c0_i32 = arith.constant 0 : i32
    %0 = arith.cmpi eq, %arg1, %c0_i32 : i32
    %1 = arith.extui %0 : i1 to i32
    %c0_i32_0 = arith.constant 0 : i32
    %2 = arith.cmpi ne, %1, %c0_i32_0 : i32
    scf.if %2 {
      %cst_18 = arith.constant 0.000000e+00 : f32
      %32 = vector.broadcast %cst_18 : f32 to vector<256x128xf32>
      %c0_19 = arith.constant 0 : index
      %c0_20 = arith.constant 0 : index
      %33 = vector.load %arg8[%c0_19, %c0_20] : memref<256x128xf32, #tpu.memory_space<vmem>>, vector<256x128xf32>
      tpu.vector_store %arg8[%c0_19, %c0_20], %32 {strides = array<i32>} : memref<256x128xf32, #tpu.memory_space<vmem>>, vector<256x128xf32>,
    } else {
    }
    %c0 = arith.constant 0 : index
    %c0_1 = arith.constant 0 : index
    %3 = vector.load %arg2[%c0, %c0_1] : memref<256x128xf32, #tpu.memory_space<vmem>>, vector<256x128xf32>
    %4 = arith.truncf %3 : vector<256x128xf32> to vector<256x128xbf16>
    %c0_2 = arith.constant 0 : index
    %c0_3 = arith.constant 0 : index
    %5 = vector.load %arg3[%c0_2, %c0_3] : memref<128x256xbf16, #tpu.memory_space<vmem>>, vector<128x256xbf16>
    %cst = arith.constant dense<0.000000e+00> : vector<256x256xf32>
    %6 = tpu.matmul %4, %5, %cst {dimension_numbers = #tpu.dot_dimension_numbers<[1], [0], [0], [1], [0, 0, 1, 1], [], []>} : vector<256x128xbf16>, vector<128x256xbf16>, vector<256x256xf32> -> vector<256x256xf32>
    %c0_4 = arith.constant 0 : index
    %c0_5 = arith.constant 0 : index
    %7 = vector.load %arg4[%c0_4, %c0_5] : memref<1x256xf32, #tpu.memory_space<vmem>>, vector<1x256xf32>
    %8 = vector.broadcast %7 : vector<1x256xf32> to vector<256x256xf32>
    %9 = arith.addf %6, %8 : vector<256x256xf32>
    %cst_6 = arith.constant 5.000000e-01 : f32
    %10 = vector.broadcast %cst_6 : f32 to vector<256x256xf32>
    %11 = arith.mulf %10, %9 : vector<256x256xf32>
    %cst_7 = arith.constant 4.471500e-02 : f32
    %12 = vector.broadcast %cst_7 : f32 to vector<256x256xf32>
    %13 = arith.mulf %12, %9 : vector<256x256xf32>
    %14 = arith.mulf %13, %9 : vector<256x256xf32>
    %15 = arith.mulf %14, %9 : vector<256x256xf32>
    %16 = arith.addf %9, %15 : vector<256x256xf32>
    %cst_8 = arith.constant 0.797884583 : f32
    %17 = vector.broadcast %cst_8 : f32 to vector<256x256xf32>
    %18 = arith.mulf %17, %16 : vector<256x256xf32>
    %19 = math.tanh %18 : vector<256x256xf32>
    %cst_9 = arith.constant 1.000000e+00 : f32
    %20 = vector.broadcast %cst_9 : f32 to vector<256x256xf32>
    %21 = arith.addf %20, %19 : vector<256x256xf32>
    %22 = arith.mulf %11, %21 : vector<256x256xf32>
    %c0_10 = arith.constant 0 : index
    %c0_11 = arith.constant 0 : index
    %23 = vector.load %arg8[%c0_10, %c0_11] : memref<256x128xf32, #tpu.memory_space<vmem>>, vector<256x128xf32>
    %24 = arith.truncf %22 : vector<256x256xf32> to vector<256x256xbf16>
    %c0_12 = arith.constant 0 : index
    %c0_13 = arith.constant 0 : index
    %25 = vector.load %arg5[%c0_12, %c0_13] : memref<256x128xbf16, #tpu.memory_space<vmem>>, vector<256x128xbf16>
    %cst_14 = arith.constant dense<0.000000e+00> : vector<256x128xf32>
    %26 = tpu.matmul %24, %25, %cst_14 {dimension_numbers = #tpu.dot_dimension_numbers<[1], [0], [0], [1], [0, 0, 1, 1], [], []>} : vector<256x256xbf16>, vector<256x128xbf16>, vector<256x128xf32> -> vector<256x128xf32>
    %27 = arith.addf %23, %26 : vector<256x128xf32>
    %c0_15 = arith.constant 0 : index
    %c0_16 = arith.constant 0 : index
    %28 = vector.load %arg8[%c0_15, %c0_16] : memref<256x128xf32, #tpu.memory_space<vmem>>, vector<256x128xf32>
    tpu.vector_store %arg8[%c0_15, %c0_16], %27 {strides = array<i32>} : memref<256x128xf32, #tpu.memory_space<vmem>>, vector<256x128xf32>,
    %c1_i32 = arith.constant 1 : i32
    %29 = arith.cmpi eq, %arg1, %c1_i32 : i32
    %30 = arith.extui %29 : i1 to i32
    %c0_i32_17 = arith.constant 0 : i32
    %31 = arith.cmpi ne, %30, %c0_i32_17 : i32
    scf.if %31 {
      %c0_18 = arith.constant 0 : index
      %c0_19 = arith.constant 0 : index
      %32 = vector.load %arg8[%c0_18, %c0_19] : memref<256x128xf32, #tpu.memory_space<vmem>>, vector<256x128xf32>
      %c0_20 = arith.constant 0 : index
      %c0_21 = arith.constant 0 : index
      %33 = vector.load %arg6[%c0_20, %c0_21] : memref<1x128xf32, #tpu.memory_space<vmem>>, vector<1x128xf32>
      %34 = vector.broadcast %33 : vector<1x128xf32> to vector<256x128xf32>
      %35 = arith.addf %32, %34 : vector<256x128xf32>
      %36 = arith.truncf %35 : vector<256x128xf32> to vector<256x128xbf16>
      %c0_22 = arith.constant 0 : index
      %c0_23 = arith.constant 0 : index
      %37 = vector.load %arg7[%c0_22, %c0_23] : memref<256x128xbf16, #tpu.memory_space<vmem>>, vector<256x128xbf16>
      tpu.vector_store %arg7[%c0_22, %c0_23], %36 {strides = array<i32>} : memref<256x128xbf16, #tpu.memory_space<vmem>>, vector<256x128xbf16>,
    } else {
    }
    return
  }
  func.func @transform_0(%arg0: i32, %arg1: i32) -> (i32, i32) {
    %c0_i32 = arith.constant 0 : i32
    %c0_i32_0 = arith.constant 0 : i32
    return %arg0, %c0_i32 : i32, i32
  }
  func.func @transform_1(%arg0: i32, %arg1: i32) -> (i32, i32) {
    %c0_i32 = arith.constant 0 : i32
    %c0_i32_0 = arith.constant 0 : i32
    return %c0_i32, %arg1 : i32, i32
  }
  func.func @transform_2(%arg0: i32, %arg1: i32) -> (i32, i32) {
    %c0_i32 = arith.constant 0 : i32
    %c0_i32_0 = arith.constant 0 : i32
    return %c0_i32, %arg1 : i32, i32
  }
  func.func @transform_3(%arg0: i32, %arg1: i32) -> (i32, i32) {
    %c0_i32 = arith.constant 0 : i32
    %c0_i32_0 = arith.constant 0 : i32
    return %arg1, %c0_i32 : i32, i32
  }
  func.func @transform_4(%arg0: i32, %arg1: i32) -> (i32, i32) {
    %c0_i32 = arith.constant 0 : i32
    %c0_i32_0 = arith.constant 0 : i32
    %c0_i32_1 = arith.constant 0 : i32
    return %c0_i32, %c0_i32_0 : i32, i32
  }
  func.func @transform_5(%arg0: i32, %arg1: i32) -> (i32, i32) {
    %c0_i32 = arith.constant 0 : i32
    %c0_i32_0 = arith.constant 0 : i32
    return %arg0, %c0_i32 : i32, i32
  }
}

</mosaic_0001>

<llo_original>
// kernel: tpu_custom_call.1
$region0: #{tpu_custom_call.1}
  #allocation0 [shape = 'u32[]', space=smem, size = 0x4, offset = 0x4, fixed_abs, tag = 'smem constant byte address 0x4 - core index']
  #allocation1 [shape = 'u32[144,128]{1,0:T(1,128)}', space=vmem, size = 0x12000, scoped, tag = 'internal scratch']
  #allocation2 [shape = 'f32[256,128]{1,0:T(8,128)}', space=vmem, size = 0x20000, scoped, tag = 'scratch operand']
  %s0 = inlined_call_operand.hbm [shape: f32[512,128], index: 0, kind: input, shape index: {}]
  %s1 = inlined_call_operand.hbm [shape: bf16[128,512], index: 1, kind: input, shape index: {}]
  %s2 = inlined_call_operand.vmem [shape: f32[1,512], index: 2, kind: input, shape index: {}]
  %s3 = inlined_call_operand.hbm [shape: bf16[512,128], index: 3, kind: input, shape index: {}]
  %s4 = inlined_call_operand.vmem [shape: f32[1,128], index: 4, kind: input, shape index: {}]
  %s5 = inlined_call_operand.hbm [shape: bf16[512,128], index: 5, kind: output, shape index: {}]
  %s6 = sld [smem:[#allocation0]]
  $region73: #{tpu_custom_call.1} parent=0
    _
  %s8 = ssub.s32 1, %s6
  %s9 = scalar_select 0, %s8, %s6
  $region1: #{tpu_custom_call.1} parent=0
    #allocation3 [shape = 'u8[262144]{0}', space=vmem, size = 0x40000, scoped, tag = 'input window, operand 0']
    #allocation4 [shape = 's32[2]{0}', space=sflag, size = 0x8, scoped, tag = 'scoped memory for tpu_custom_call.1']
    #allocation5 [shape = 's32[2]{0}', space=sflag, size = 0x8, scoped, tag = 'scoped memory for tpu_custom_call.1']
    #allocation6 [shape = 'u8[131072]{0}', space=vmem, size = 0x20000, scoped, tag = 'input window, operand 1']
    #allocation7 [shape = 's32[2]{0}', space=sflag, size = 0x8, scoped, tag = 'scoped memory for tpu_custom_call.1']
    #allocation8 [shape = 'u8[131072]{0}', space=vmem, size = 0x20000, scoped, tag = 'input window, operand 3']
    #allocation9 [shape = 'u8[131072]{0}', space=vmem, size = 0x20000, scoped, tag = 'output window, operand 0']
    %10 = vsyncpa [#allocation4], 0
    %s11 = scalar_lea.sflag [#allocation4], 1
    %12 = vsyncpa %s11, 0
    %13 = vsyncpa [#allocation7], 0
    %s14 = scalar_lea.sflag [#allocation7], 1
    %15 = vsyncpa %s14, 0
    %16 = vsyncpa [#allocation5], 0
    %s17 = scalar_lea.sflag [#allocation5], 1
    %18 = vsyncpa %s17, 0
    loop: start=0, step=1, limit=6
    $region2: #{tpu_custom_call.1} parent=1 // loop_pre_header
      _
    $region3: #{tpu_custom_call.1} parent=1 // loop_header
      %s20 = sphi 0, %s24
      %p21 = scmp.ge.s32.totalorder %s20, 6
      %s27 = sphi 0, %s39
      %s28 = sphi 0, %s35
      %s29 = sphi 0, %s27
      %s30 = sphi 0, %s28
      %s31 = sphi 0, %s29
      %s32 = sphi 0, %s30
      %s42 = sphi 0, %s44
      %s45 = sphi 0, %s42
      %s46 = sphi 0, %s45
      %s62 = sphi 0, %s46
      %s68 = sphi 0, %s70
      %s71 = sphi 0, %s68
      %s72 = sphi 0, %s71
      %s88 = sphi 0, %s72
      %s94 = sphi 0, %s96
      %s97 = sphi 0, %s94
      %s98 = sphi 0, %s97
      %s114 = sphi 0, %s98
      %s120 = sphi 0, %s122
      %s123 = sphi 0, %s120
      %s124 = sphi 0, %s123
      %s140 = sphi 0, %s124
      %s144 = sphi 0, %s144
      %s146 = sphi 0, %s144
      %s147 = sphi 0, %s146
      %s161 = sphi 0, %s147
      %s167 = sphi 0, %s169
      %s170 = sphi 0, %s167
      %s171 = sphi 0, %s170
      %s187 = sphi 0, %s171
    $region4: #{tpu_custom_call.1} parent=1 // loop_header_branch
      %23 = sbr.rel (%p21) target = $region8
    $region5: #{tpu_custom_call.1} parent=1 // loop_body
      %s25 = ssub.s32 %s20, 1
      %s26 = ssub.s32 %s20, 2
      %s33 = sadd.s32 1, %s28
      %p34 = scmp.ge.s32.totalorder %s33, 2
      %s35 = scalar_select %p34, 0, %s33
      %s36 = sadd.s32 1, %s27
      %s37 = scalar_select %p34, %s36, %s27
      %p38 = scmp.ge.s32.totalorder %s37, 2
      %s39 = scalar_select %p38, 0, %s37
      %s40 = ssub.s32 %s27, %s39
      %p41 = scmp.eq.s32.totalorder %s40, 0
      %s43 = sadd.s32 %s42, 1
      %s44 = scalar_select %p41, %s42, %s43
      %p47 = pneg %p41
      %p48 = scmp.eq.s32.totalorder %s20, 3
      %p49 = por %p47, %p48
      %p50 = scmp.ne.s32.totalorder %s42, %s45
      %p51 = scmp.eq.s32.totalorder %s20, 0
      %p52 = por %p50, %p51
      %p53 = scmp.ne.s32.totalorder %s42, %s45
      %p54 = scmp.eq.s32.totalorder %s25, 3
      %p55 = por %p53, %p54
      %p56 = scmp.ne.s32.totalorder %s45, %s46
      %p57 = scmp.eq.s32.totalorder %s25, 0
      %p58 = por %p56, %p57
      %p59 = scmp.ne.s32.totalorder %s45, %s46
      %p60 = scmp.eq.s32.totalorder %s26, 3
      %p61 = por %p59, %p60
      %p63 = scmp.ne.s32.totalorder %s46, %s62
      %p64 = scmp.eq.s32.totalorder %s26, 0
      %p65 = por %p63, %p64
      %s66 = ssub.s32 %s28, %s35
      %p67 = scmp.eq.s32.totalorder %s66, 0
      %s69 = sadd.s32 %s68, 1
      %s70 = scalar_select %p67, %s68, %s69
      %p73 = pneg %p67
      %p74 = scmp.eq.s32.totalorder %s20, 3
      %p75 = por %p73, %p74
      %p76 = scmp.ne.s32.totalorder %s68, %s71
      %p77 = scmp.eq.s32.totalorder %s20, 0
      %p78 = por %p76, %p77
      %p79 = scmp.ne.s32.totalorder %s68, %s71
      %p80 = scmp.eq.s32.totalorder %s25, 3
      %p81 = por %p79, %p80
      %p82 = scmp.ne.s32.totalorder %s71, %s72
      %p83 = scmp.eq.s32.totalorder %s25, 0
      %p84 = por %p82, %p83
      %p85 = scmp.ne.s32.totalorder %s71, %s72
      %p86 = scmp.eq.s32.totalorder %s26, 3
      %p87 = por %p85, %p86
      %p89 = scmp.ne.s32.totalorder %s72, %s88
      %p90 = scmp.eq.s32.totalorder %s26, 0
      %p91 = por %p89, %p90
      %s92 = ssub.s32 %s28, %s35
      %p93 = scmp.eq.s32.totalorder %s92, 0
      %s95 = sadd.s32 %s94, 1
      %s96 = scalar_select %p93, %s94, %s95
      %p99 = pneg %p93
      %p100 = scmp.eq.s32.totalorder %s20, 3
      %p101 = por %p99, %p100
      %p102 = scmp.ne.s32.totalorder %s94, %s97
      %p103 = scmp.eq.s32.totalorder %s20, 0
      %p104 = por %p102, %p103
      %p105 = scmp.ne.s32.totalorder %s94, %s97
      %p106 = scmp.eq.s32.totalorder %s25, 3
      %p107 = por %p105, %p106
      %p108 = scmp.ne.s32.totalorder %s97, %s98
      %p109 = scmp.eq.s32.totalorder %s25, 0
      %p110 = por %p108, %p109
      %p111 = scmp.ne.s32.totalorder %s97, %s98
      %p112 = scmp.eq.s32.totalorder %s26, 3
      %p113 = por %p111, %p112
      %p115 = scmp.ne.s32.totalorder %s98, %s114
      %p116 = scmp.eq.s32.totalorder %s26, 0
      %p117 = por %p115, %p116
      %s118 = ssub.s32 %s28, %s35
      %p119 = scmp.eq.s32.totalorder %s118, 0
      %s121 = sadd.s32 %s120, 1
      %s122 = scalar_select %p119, %s120, %s121
      %p125 = pneg %p119
      %p126 = scmp.eq.s32.totalorder %s20, 3
      %p127 = por %p125, %p126
      %p128 = scmp.ne.s32.totalorder %s120, %s123
      %p129 = scmp.eq.s32.totalorder %s20, 0
      %p130 = por %p128, %p129
      %p131 = scmp.ne.s32.totalorder %s120, %s123
      %p132 = scmp.eq.s32.totalorder %s25, 3
      %p133 = por %p131, %p132
      %p134 = scmp.ne.s32.totalorder %s123, %s124
      %p135 = scmp.eq.s32.totalorder %s25, 0
      %p136 = por %p134, %p135
      %p137 = scmp.ne.s32.totalorder %s123, %s124
      %p138 = scmp.eq.s32.totalorder %s26, 3
      %p139 = por %p137, %p138
      %p141 = scmp.ne.s32.totalorder %s124, %s140
      %p142 = scmp.eq.s32.totalorder %s26, 0
      %p143 = por %p141, %p142
      %s145 = sadd.s32 %s144, 1
      %p148 = scmp.eq.s32.totalorder %s20, 3
      %p149 = scmp.ne.s32.totalorder %s144, %s146
      %p150 = scmp.eq.s32.totalorder %s20, 0
      %p151 = por %p149, %p150
      %p152 = scmp.ne.s32.totalorder %s144, %s146
      %p153 = scmp.eq.s32.totalorder %s25, 3
      %p154 = por %p152, %p153
      %p155 = scmp.ne.s32.totalorder %s146, %s147
      %p156 = scmp.eq.s32.totalorder %s25, 0
      %p157 = por %p155, %p156
      %p158 = scmp.ne.s32.totalorder %s146, %s147
      %p159 = scmp.eq.s32.totalorder %s26, 3
      %p160 = por %p158, %p159
      %p162 = scmp.ne.s32.totalorder %s147, %s161
      %p163 = scmp.eq.s32.totalorder %s26, 0
      %p164 = por %p162, %p163
      %s165 = ssub.s32 %s27, %s39
      %p166 = scmp.eq.s32.totalorder %s165, 0
      %s168 = sadd.s32 %s167, 1
      %s169 = scalar_select %p166, %s167, %s168
      %p172 = pneg %p166
      %p173 = scmp.eq.s32.totalorder %s20, 3
      %p174 = por %p172, %p173
      %p175 = scmp.ne.s32.totalorder %s167, %s170
      %p176 = scmp.eq.s32.totalorder %s20, 0
      %p177 = por %p175, %p176
      %p178 = scmp.ne.s32.totalorder %s167, %s170
      %p179 = scmp.eq.s32.totalorder %s25, 3
      %p180 = por %p178, %p179
      %p181 = scmp.ne.s32.totalorder %s170, %s171
      %p182 = scmp.eq.s32.totalorder %s25, 0
      %p183 = por %p181, %p182
      %p184 = scmp.ne.s32.totalorder %s170, %s171
      %p185 = scmp.eq.s32.totalorder %s26, 3
      %p186 = por %p184, %p185
      %p188 = scmp.ne.s32.totalorder %s171, %s187
      %p189 = scmp.eq.s32.totalorder %s26, 0
      %p190 = por %p188, %p189
      %p191 = scmp.le.s32.totalorder 1, %s20
      %p192 = scmp.lt.s32.totalorder %s20, 5
      %p193 = pnand %p191, %p192
      %p194 = pneg %p193
      // Predicated region
      $region9: #{tpu_custom_call.1} parent=5 // pred_check
        _
      $region10: #{tpu_custom_call.1} parent=5 // pred_check_branch
        %196 = sbr.rel (%p193) target = $region12
      $region11: #{tpu_custom_call.1} parent=5 // pred_region
        %s197 = ssub.s32 %s20, 1
        // Predicated region
        $region13: #{tpu_custom_call.1} parent=11 // pred_check
          %p198 = pneg %p157
        $region14: #{tpu_custom_call.1} parent=11 // pred_check_branch
          %200 = sbr.rel (%p198) target = $region16
        $region15: #{tpu_custom_call.1} parent=11 // pred_region
          _
        $region16: #{tpu_custom_call.1} parent=11 // pred_fallthru
          _
      $region12: #{tpu_custom_call.1} parent=5 // pred_fallthru
        _
      %p201 = scmp.lt.s32.totalorder %s20, 4
      // Predicated region
      $region17: #{tpu_custom_call.1} parent=5 // pred_check
        %p202 = pneg %p201
      $region18: #{tpu_custom_call.1} parent=5 // pred_check_branch
        %204 = sbr.rel (%p202) target = $region20
      $region19: #{tpu_custom_call.1} parent=5 // pred_region
        // Predicated region
        $region21: #{tpu_custom_call.1} parent=19 // pred_check
          %p205 = pneg %p52
        $region22: #{tpu_custom_call.1} parent=19 // pred_check_branch
          %207 = sbr.rel (%p205) target = $region24
        $region23: #{tpu_custom_call.1} parent=19 // pred_region
          %s208 = sand.u32 %s42, 1
          %s209 = scalar_lea.sflag [#allocation4], %s208
          %s210 = sand.u32 %s42, 1
          %s211 = smul.addr %s210, 256
          %s212 = scalar_lea.vmem [#allocation3], %s211
          %s213 = smul.u32 32, %s27
          %s215 = ssub.s32 4096, 4096
          %216 = vsyncadd %s209, %s215
          %s217 = smul.addr %s213, 128
          %s218 = scalar_lea.hbm %s0, %s217
          %s219 = sshll.u32 %s212, 4
          %s220 = int_to_ptr.vmem [resolvable:$true] %s219
          %225 = dma.hbm_to_vmem [thread:$0]  %s218, 4096, %s220, %s209, 128, 128, 8
        $region24: #{tpu_custom_call.1} parent=19 // pred_fallthru
          _
        // Predicated region
        $region25: #{tpu_custom_call.1} parent=19 // pred_check
          %p226 = pneg %p78
        $region26: #{tpu_custom_call.1} parent=19 // pred_check_branch
          %228 = sbr.rel (%p226) target = $region28
        $region27: #{tpu_custom_call.1} parent=19 // pred_region
          %s229 = sand.u32 %s20, 1
          %s230 = scalar_lea.sflag [#allocation7], %s229
          %s231 = sand.u32 %s68, 1
          %s232 = smul.addr %s231, 128
          %s233 = scalar_lea.vmem [#allocation6], %s232
          %s234 = smul.u32 2, %s28
          %s236 = ssub.s32 2048, 2048
          %237 = vsyncadd %s230, %s236
          %s238 = smul.addr %s234, 64
          %s239 = scalar_lea.hbm %s1, %s238
          %s240 = sshll.u32 %s233, 4
          %s241 = int_to_ptr.vmem [resolvable:$true] %s240
          %246 = dma.hbm_to_vmem [thread:$0]  %s239, 2048, %s241, %s230, 256, 128, 8
        $region28: #{tpu_custom_call.1} parent=19 // pred_fallthru
          _
        // Predicated region
        $region29: #{tpu_custom_call.1} parent=19 // pred_check
          %p247 = pneg %p104
        $region30: #{tpu_custom_call.1} parent=19 // pred_check_branch
          %249 = sbr.rel (%p247) target = $region32
        $region31: #{tpu_custom_call.1} parent=19 // pred_region
          %s250 = smul.u32 2, %s28
          %p251 = scmp.lt.s32.totalorder %s250, 3
          %s252 = scalar_select %p251, %s250, 3
          %s253 = scalar_lea.vmem %s2, %s252
          %s254 = smul.u32 2, %s28
        $region32: #{tpu_custom_call.1} parent=19 // pred_fallthru
          _
        // Predicated region
        $region33: #{tpu_custom_call.1} parent=19 // pred_check
          %p255 = pneg %p130
        $region34: #{tpu_custom_call.1} parent=19 // pred_check_branch
          %257 = sbr.rel (%p255) target = $region36
        $region35: #{tpu_custom_call.1} parent=19 // pred_region
          %s258 = sand.u32 %s20, 1
          %s259 = scalar_lea.sflag [#allocation7], %s258
          %s260 = sand.u32 %s120, 1
          %s261 = smul.addr %s260, 128
          %s262 = scalar_lea.vmem [#allocation8], %s261
          %s263 = smul.u32 32, %s28
          %s265 = ssub.s32 2048, 2048
          %266 = vsyncadd %s259, %s265
          %s267 = smul.addr %s263, 64
          %s268 = scalar_lea.hbm %s3, %s267
          %s269 = sshll.u32 %s262, 4
          %s270 = int_to_ptr.vmem [resolvable:$true] %s269
          %275 = dma.hbm_to_vmem [thread:$0]  %s268, 2048, %s270, %s259, 64, 64, 4
        $region36: #{tpu_custom_call.1} parent=19 // pred_fallthru
          _
      $region20: #{tpu_custom_call.1} parent=5 // pred_fallthru
        _
      %p276 = scmp.le.s32.totalorder 1, %s20
      %p277 = scmp.lt.s32.totalorder %s20, 5
      %p278 = pnand %p276, %p277
      %p279 = pneg %p278
      // Predicated region
      $region37: #{tpu_custom_call.1} parent=5 // pred_check
        _
      $region38: #{tpu_custom_call.1} parent=5 // pred_check_branch
        %281 = sbr.rel (%p278) target = $region40
      $region39: #{tpu_custom_call.1} parent=5 // pred_region
        %s282 = ssub.s32 %s20, 1
        %s283 = sand.u32 %s45, 1
        %s284 = scalar_lea.sflag [#allocation4], %s283
        %s285 = sand.u32 %s45, 1
        %s286 = smul.addr %s285, 256
        %s287 = scalar_lea.vmem [#allocation3], %s286
        // Predicated region
        $region41: #{tpu_custom_call.1} parent=39 // pred_check
          %p288 = pneg %p58
        $region42: #{tpu_custom_call.1} parent=39 // pred_check_branch
          %290 = sbr.rel (%p288) target = $region44
        $region43: #{tpu_custom_call.1} parent=39 // pred_region
          %291 = dma.done %s284, 4096
        $region44: #{tpu_custom_call.1} parent=39 // pred_fallthru
          _
        %s292 = sand.u32 %s25, 1
        %s293 = scalar_lea.sflag [#allocation7], %s292
        %s294 = sand.u32 %s71, 1
        %s295 = smul.addr %s294, 128
        %s296 = scalar_lea.vmem [#allocation6], %s295
        // Predicated region
        $region45: #{tpu_custom_call.1} parent=39 // pred_check
          %p297 = pneg %p84
        $region46: #{tpu_custom_call.1} parent=39 // pred_check_branch
          %299 = sbr.rel (%p297) target = $region48
        $region47: #{tpu_custom_call.1} parent=39 // pred_region
          %300 = dma.done %s293, 2048
        $region48: #{tpu_custom_call.1} parent=39 // pred_fallthru
          _
        %s301 = sand.u32 %s25, 1
        %s302 = scalar_lea.sflag [#allocation7], %s301
        %s303 = sand.u32 %s123, 1
        %s304 = smul.addr %s303, 128
        %s305 = scalar_lea.vmem [#allocation8], %s304
        // Predicated region
        $region49: #{tpu_custom_call.1} parent=39 // pred_check
          %p306 = pneg %p136
        $region50: #{tpu_custom_call.1} parent=39 // pred_check_branch
          %308 = sbr.rel (%p306) target = $region52
        $region51: #{tpu_custom_call.1} parent=39 // pred_region
          %309 = dma.done %s302, 2048
        $region52: #{tpu_custom_call.1} parent=39 // pred_fallthru
          _
        %s310 = sand.u32 %s45, 1
        %s311 = scalar_lea.sflag [#allocation4], %s310
        %s312 = sand.u32 %s45, 1
        %s313 = smul.addr %s312, 256
        %s314 = scalar_lea.vmem [#allocation3], %s313
        %p315 = pneg %p58
        %p316 = pneg %p55
        %s317 = sand.u32 %s25, 1
        %s318 = scalar_lea.sflag [#allocation7], %s317
        %s319 = sand.u32 %s71, 1
        %s320 = smul.addr %s319, 128
        %s321 = scalar_lea.vmem [#allocation6], %s320
        %p322 = pneg %p84
        %p323 = pneg %p81
        %s324 = smul.u32 2, %s30
        %p325 = scmp.lt.s32.totalorder %s324, 3
        %s326 = scalar_select %p325, %s324, 3
        %s327 = scalar_lea.vmem %s2, %s326
        %p328 = pneg %p110
        %p329 = pneg %p107
        %s330 = sand.u32 %s25, 1
        %s331 = scalar_lea.sflag [#allocation7], %s330
        %s332 = sand.u32 %s123, 1
        %s333 = smul.addr %s332, 128
        %s334 = scalar_lea.vmem [#allocation8], %s333
        %p335 = pneg %p136
        %p336 = pneg %p133
        %p337 = pneg %p157
        %p338 = pneg %p154
        %p339 = pneg %p183
        %p340 = pneg %p180
        %s341 = sand.u32 %s170, 1
        %s342 = scalar_lea.sflag [#allocation5], %s341
        %s343 = sand.u32 %s170, 1
        %s344 = smul.addr %s343, 128
        %s345 = scalar_lea.vmem [#allocation9], %s344
        %s346 = smul.u32 32, %s29
        %s347 = smul.u32 2, %s30
        %s348 = smul.u32 2, %s30
        %p349 = scmp.lt.s32.totalorder %s348, 3
        %s350 = scalar_select %p349, %s348, 3
        %s351 = scalar_lea.vmem %s2, %s350
        %s352 = smul.u32 2, %s30
        %s353 = smul.u32 32, %s30
        %s354 = smul.u32 32, %s29
        %p356 = scmp.eq.s32.totalorder %s30, 0
        // Predicated region
        $region53: #{tpu_custom_call.1} parent=39 // pred_check
          %p357 = pneg %p356
        $region54: #{tpu_custom_call.1} parent=39 // pred_check_branch
          %359 = sbr.rel (%p357) target = $region56
        $region55: #{tpu_custom_call.1} parent=39 // pred_region
          %360 = vst [vmem:[#allocation2] sm:$0xff] 0.0
          %361 = vst [vmem:[#allocation2 + $0x8] sm:$0xff] 0.0
          %362 = vst [vmem:[#allocation2 + $0x10] sm:$0xff] 0.0
          %363 = vst [vmem:[#allocation2 + $0x18] sm:$0xff] 0.0
          %364 = vst [vmem:[#allocation2 + $0x20] sm:$0xff] 0.0
          %365 = vst [vmem:[#allocation2 + $0x28] sm:$0xff] 0.0
          %366 = vst [vmem:[#allocation2 + $0x30] sm:$0xff] 0.0
          %367 = vst [vmem:[#allocation2 + $0x38] sm:$0xff] 0.0
          %368 = vst [vmem:[#allocation2 + $0x40] sm:$0xff] 0.0
          %369 = vst [vmem:[#allocation2 + $0x48] sm:$0xff] 0.0
          %370 = vst [vmem:[#allocation2 + $0x50] sm:$0xff] 0.0
          %371 = vst [vmem:[#allocation2 + $0x58] sm:$0xff] 0.0
          %372 = vst [vmem:[#allocation2 + $0x60] sm:$0xff] 0.0
          %373 = vst [vmem:[#allocation2 + $0x68] sm:$0xff] 0.0
          %374 = vst [vmem:[#allocation2 + $0x70] sm:$0xff] 0.0
          %375 = vst [vmem:[#allocation2 + $0x78] sm:$0xff] 0.0
          %376 = vst [vmem:[#allocation2 + $0x80] sm:$0xff] 0.0
          %377 = vst [vmem:[#allocation2 + $0x88] sm:$0xff] 0.0
          %378 = vst [vmem:[#allocation2 + $0x90] sm:$0xff] 0.0
          %379 = vst [vmem:[#allocation2 + $0x98] sm:$0xff] 0.0
          %380 = vst [vmem:[#allocation2 + $0xa0] sm:$0xff] 0.0
          %381 = vst [vmem:[#allocation2 + $0xa8] sm:$0xff] 0.0
          %382 = vst [vmem:[#allocation2 + $0xb0] sm:$0xff] 0.0
          %383 = vst [vmem:[#allocation2 + $0xb8] sm:$0xff] 0.0
          %384 = vst [vmem:[#allocation2 + $0xc0] sm:$0xff] 0.0
          %385 = vst [vmem:[#allocation2 + $0xc8] sm:$0xff] 0.0
          %386 = vst [vmem:[#allocation2 + $0xd0] sm:$0xff] 0.0
          %387 = vst [vmem:[#allocation2 + $0xd8] sm:$0xff] 0.0
          %388 = vst [vmem:[#allocation2 + $0xe0] sm:$0xff] 0.0
          %389 = vst [vmem:[#allocation2 + $0xe8] sm:$0xff] 0.0
          %390 = vst [vmem:[#allocation2 + $0xf0] sm:$0xff] 0.0
          %391 = vst [vmem:[#allocation2 + $0xf8] sm:$0xff] 0.0
        $region56: #{tpu_custom_call.1} parent=39 // pred_fallthru
          _
        %v392 = vld [vmem:[%s287] sm:$0xff]
        %v393 = vld [vmem:[%s287 + $0x8] sm:$0xff]
        %v394 = vld [vmem:[%s287 + $0x10] sm:$0xff]
        %v395 = vld [vmem:[%s287 + $0x18] sm:$0xff]
        %v396 = vld [vmem:[%s287 + $0x20] sm:$0xff]
        %v397 = vld [vmem:[%s287 + $0x28] sm:$0xff]
        %v398 = vld [vmem:[%s287 + $0x30] sm:$0xff]
        %v399 = vld [vmem:[%s287 + $0x38] sm:$0xff]
        %v400 = vld [vmem:[%s287 + $0x40] sm:$0xff]
        %v401 = vld [vmem:[%s287 + $0x48] sm:$0xff]
        %v402 = vld [vmem:[%s287 + $0x50] sm:$0xff]
        %v403 = vld [vmem:[%s287 + $0x58] sm:$0xff]
        %v404 = vld [vmem:[%s287 + $0x60] sm:$0xff]
        %v405 = vld [vmem:[%s287 + $0x68] sm:$0xff]
        %v406 = vld [vmem:[%s287 + $0x70] sm:$0xff]
        %v407 = vld [vmem:[%s287 + $0x78] sm:$0xff]
        %v408 = vld [vmem:[%s287 + $0x80] sm:$0xff]
        %v409 = vld [vmem:[%s287 + $0x88] sm:$0xff]
        %v410 = vld [vmem:[%s287 + $0x90] sm:$0xff]
        %v411 = vld [vmem:[%s287 + $0x98] sm:$0xff]
        %v412 = vld [vmem:[%s287 + $0xa0] sm:$0xff]
        %v413 = vld [vmem:[%s287 + $0xa8] sm:$0xff]
        %v414 = vld [vmem:[%s287 + $0xb0] sm:$0xff]
        %v415 = vld [vmem:[%s287 + $0xb8] sm:$0xff]
        %v416 = vld [vmem:[%s287 + $0xc0] sm:$0xff]
        %v417 = vld [vmem:[%s287 + $0xc8] sm:$0xff]
        %v418 = vld [vmem:[%s287 + $0xd0] sm:$0xff]
        %v419 = vld [vmem:[%s287 + $0xd8] sm:$0xff]
        %v420 = vld [vmem:[%s287 + $0xe0] sm:$0xff]
        %v421 = vld [vmem:[%s287 + $0xe8] sm:$0xff]
        %v422 = vld [vmem:[%s287 + $0xf0] sm:$0xff]
        %v423 = vld [vmem:[%s287 + $0xf8] sm:$0xff]
        %v424 = vpack.c.bf16 %v393, %v392
        %v425 = vpack.c.bf16 %v395, %v394
        %v426 = vpack.c.bf16 %v397, %v396
        %v427 = vpack.c.bf16 %v399, %v398
        %v428 = vpack.c.bf16 %v401, %v400
        %v429 = vpack.c.bf16 %v403, %v402
        %v430 = vpack.c.bf16 %v405, %v404
        %v431 = vpack.c.bf16 %v407, %v406
        %v432 = vpack.c.bf16 %v409, %v408
        %v433 = vpack.c.bf16 %v411, %v410
        %v434 = vpack.c.bf16 %v413, %v412
        %v435 = vpack.c.bf16 %v415, %v414
        %v436 = vpack.c.bf16 %v417, %v416
        %v437 = vpack.c.bf16 %v419, %v418
        %v438 = vpack.c.bf16 %v421, %v420
        %v439 = vpack.c.bf16 %v423, %v422
        %v440 = vld [vmem:[%s296] sm:$0xff]
        %v441 = vld [vmem:[%s296 + $0x8] sm:$0xff]
        %v442 = vld [vmem:[%s296 + $0x10] sm:$0xff]
        %v443 = vld [vmem:[%s296 + $0x18] sm:$0xff]
        %v444 = vld [vmem:[%s296 + $0x20] sm:$0xff]
        %v445 = vld [vmem:[%s296 + $0x28] sm:$0xff]
        %v446 = vld [vmem:[%s296 + $0x30] sm:$0xff]
        %v447 = vld [vmem:[%s296 + $0x38] sm:$0xff]
        %v448 = vld [vmem:[%s296 + $0x40] sm:$0xff]
        %v449 = vld [vmem:[%s296 + $0x48] sm:$0xff]
        %v450 = vld [vmem:[%s296 + $0x50] sm:$0xff]
        %v451 = vld [vmem:[%s296 + $0x58] sm:$0xff]
        %v452 = vld [vmem:[%s296 + $0x60] sm:$0xff]
        %v453 = vld [vmem:[%s296 + $0x68] sm:$0xff]
        %v454 = vld [vmem:[%s296 + $0x70] sm:$0xff]
        %v455 = vld [vmem:[%s296 + $0x78] sm:$0xff]
        %v456 = vld [vmem:[%s351] sm:$0x3]
        %v458 = vlaneseq
        %v459 = vshrl.u32 %v458, 7
        %v460 = vsub.s32 0, %v459
        %v461 = vrot.slane %v456, %v460
        %v462 = vlaneseq
        %v463 = vshrl.u32 %v462, 7
        %v464 = vsub.s32 1, %v463
        %v465 = vrot.slane %v456, %v464
        %v484 = vunpack.c.l.b16 %v440
        %v485 = vunpack.c.h.b16 %v440
        %v486 = vunpack.c.l.b16 %v441
        %v487 = vunpack.c.h.b16 %v441
        %v488 = vunpack.c.l.b16 %v442
        %v489 = vunpack.c.h.b16 %v442
        %v490 = vunpack.c.l.b16 %v443
        %v491 = vunpack.c.h.b16 %v443
        %v492 = vunpack.c.l.b16 %v444
        %v493 = vunpack.c.h.b16 %v444
        %v494 = vunpack.c.l.b16 %v445
        %v495 = vunpack.c.h.b16 %v445
        %v496 = vunpack.c.l.b16 %v446
        %v497 = vunpack.c.h.b16 %v446
        %v498 = vunpack.c.l.b16 %v447
        %v499 = vunpack.c.h.b16 %v447
        %v500 = vunpack.c.l.b16 %v448
        %v501 = vunpack.c.h.b16 %v448
        %v502 = vunpack.c.l.b16 %v449
        %v503 = vunpack.c.h.b16 %v449
        %v504 = vunpack.c.l.b16 %v450
        %v505 = vunpack.c.h.b16 %v450
        %v506 = vunpack.c.l.b16 %v451
        %v507 = vunpack.c.h.b16 %v451
        %v508 = vunpack.c.l.b16 %v452
        %v509 = vunpack.c.h.b16 %v452
        %v510 = vunpack.c.l.b16 %v453
        %v511 = vunpack.c.h.b16 %v453
        %v512 = vunpack.c.l.b16 %v454
        %v513 = vunpack.c.h.b16 %v454
        %v514 = vunpack.c.l.b16 %v455
        %v515 = vunpack.c.h.b16 %v455
        %v516 = vpack.c.b16 %v486, %v484
        %v517 = vpack.c.b16 %v487, %v485
        %v518 = vpack.c.b16 %v490, %v488
        %v519 = vpack.c.b16 %v491, %v489
        %v520 = vpack.c.b16 %v494, %v492
        %v521 = vpack.c.b16 %v495, %v493
        %v522 = vpack.c.b16 %v498, %v496
        %v523 = vpack.c.b16 %v499, %v497
        %v524 = vpack.c.b16 %v502, %v500
        %v525 = vpack.c.b16 %v503, %v501
        %v526 = vpack.c.b16 %v506, %v504
        %v527 = vpack.c.b16 %v507, %v505
        %v528 = vpack.c.b16 %v510, %v508
        %v529 = vpack.c.b16 %v511, %v509
        %v530 = vpack.c.b16 %v514, %v512
        %v531 = vpack.c.b16 %v515, %v513
        %548 = vmatprep.subr.bf16.mxu0 %v517
        %549 = vmatpush1.bf16.msra.mxu0 %v516
        %550 = vmatprep.subr.bf16.mxu0 %v519
        %551 = vmatpush1.bf16.msra.mxu0 %v518
        %552 = vmatprep.subr.bf16.mxu0 %v521
        %553 = vmatpush1.bf16.msra.mxu0 %v520
        %554 = vmatprep.subr.bf16.mxu0 %v523
        %555 = vmatpush1.bf16.msra.mxu0 %v522
        %556 = vmatprep.subr.bf16.mxu0 %v525
        %557 = vmatpush1.bf16.msra.mxu0 %v524
        %558 = vmatprep.subr.bf16.mxu0 %v527
        %559 = vmatpush1.bf16.msra.mxu0 %v526
        %560 = vmatprep.subr.bf16.mxu0 %v529
        %561 = vmatpush1.bf16.msra.mxu0 %v528
        %562 = vmatprep.subr.bf16.mxu0 %v531
        %563 = vmatpush1.bf16.msra.mxu0 %v530
        %564 = vmatprep.subr.bf16.mxu0 0
        %565 = vmatpush1.bf16.msra.mxu0 0
        %566 = vmatprep.subr.bf16.mxu0 0
        %567 = vmatpush1.bf16.msra.mxu0 0
        %568 = vmatprep.subr.bf16.mxu0 0
        %569 = vmatpush1.bf16.msra.mxu0 0
        %570 = vmatprep.subr.bf16.mxu0 0
        %571 = vmatpush1.bf16.msra.mxu0 0
        %572 = vmatprep.subr.bf16.mxu0 0
        %573 = vmatpush1.bf16.msra.mxu0 0
        %574 = vmatprep.subr.bf16.mxu0 0
        %575 = vmatpush1.bf16.msra.mxu0 0
        %576 = vmatprep.subr.bf16.mxu0 0
        %577 = vmatpush1.bf16.msra.mxu0 0
        %578 = vmatprep.subr.bf16.mxu0 0
        %579 = vmatpush1.bf16.msra.mxu0 0
        %580 = vmatprep.mubr.bf16.mxu0 0
        %581 = vmatmul.mubr.bf16.gmra.mrb[0].mxu0 %v424
        %v582 = vpop.f32.mrb[0].mxu0
        %v583 = vadd.f32 %v461, %v582
        %v584 = vpop.f32.mrb[0].mxu0
        %v585 = vadd.f32 %v465, %v584
        %v586 = vpop.f32.mrb[0].mxu0
        %v587 = vadd.f32 %v461, %v586
        %v588 = vpop.f32.mrb[0].mxu0
        %v589 = vadd.f32 %v465, %v588
        %590 = vmatprep.mubr.bf16.mxu0 0
        %591 = vmatmul.mubr.bf16.gmra.mrb[0].mxu0 %v425
        %v592 = vpop.f32.mrb[0].mxu0
        %v593 = vadd.f32 %v461, %v592
        %v594 = vpop.f32.mrb[0].mxu0
        %v595 = vadd.f32 %v465, %v594
        %v596 = vpop.f32.mrb[0].mxu0
        %v597 = vadd.f32 %v461, %v596
        %v598 = vpop.f32.mrb[0].mxu0
        %v599 = vadd.f32 %v465, %v598
        %600 = vmatprep.mubr.bf16.mxu0 0
        %601 = vmatmul.mubr.bf16.gmra.mrb[0].mxu0 %v426
        %v602 = vpop.f32.mrb[0].mxu0
        %v603 = vadd.f32 %v461, %v602
        %v604 = vpop.f32.mrb[0].mxu0
        %v605 = vadd.f32 %v465, %v604
        %v606 = vpop.f32.mrb[0].mxu0
        %v607 = vadd.f32 %v461, %v606
        %v608 = vpop.f32.mrb[0].mxu0
        %v609 = vadd.f32 %v465, %v608
        %610 = vmatprep.mubr.bf16.mxu0 0
        %611 = vmatmul.mubr.bf16.gmra.mrb[0].mxu0 %v427
        %v612 = vpop.f32.mrb[0].mxu0
        %v613 = vadd.f32 %v461, %v612
        %v614 = vpop.f32.mrb[0].mxu0
        %v615 = vadd.f32 %v465, %v614
        %v616 = vpop.f32.mrb[0].mxu0
        %v617 = vadd.f32 %v461, %v616
        %v618 = vpop.f32.mrb[0].mxu0
        %v619 = vadd.f32 %v465, %v618
        %620 = vmatprep.mubr.bf16.mxu0 0
        %621 = vmatmul.mubr.bf16.gmra.mrb[0].mxu0 %v428
        %v622 = vpop.f32.mrb[0].mxu0
        %v623 = vadd.f32 %v461, %v622
        %v624 = vpop.f32.mrb[0].mxu0
        %v625 = vadd.f32 %v465, %v624
        %v626 = vpop.f32.mrb[0].mxu0
        %v627 = vadd.f32 %v461, %v626
        %v628 = vpop.f32.mrb[0].mxu0
        %v629 = vadd.f32 %v465, %v628
        %630 = vmatprep.mubr.bf16.mxu0 0
        %631 = vmatmul.mubr.bf16.gmra.mrb[0].mxu0 %v429
        %v632 = vpop.f32.mrb[0].mxu0
        %v633 = vadd.f32 %v461, %v632
        %v634 = vpop.f32.mrb[0].mxu0
        %v635 = vadd.f32 %v465, %v634
        %v636 = vpop.f32.mrb[0].mxu0
        %v637 = vadd.f32 %v461, %v636
        %v638 = vpop.f32.mrb[0].mxu0
        %v639 = vadd.f32 %v465, %v638
        %640 = vmatprep.mubr.bf16.mxu0 0
        %641 = vmatmul.mubr.bf16.gmra.mrb[0].mxu0 %v430
        %v642 = vpop.f32.mrb[0].mxu0
        %v643 = vadd.f32 %v461, %v642
        %v644 = vpop.f32.mrb[0].mxu0
        %v645 = vadd.f32 %v465, %v644
        %v646 = vpop.f32.mrb[0].mxu0
        %v647 = vadd.f32 %v461, %v646
        %v648 = vpop.f32.mrb[0].mxu0
        %v649 = vadd.f32 %v465, %v648
        %650 = vmatprep.mubr.bf16.mxu0 0
        %651 = vmatmul.mubr.bf16.gmra.mrb[0].mxu0 %v431
        %v652 = vpop.f32.mrb[0].mxu0
        %v653 = vadd.f32 %v461, %v652
        %v654 = vpop.f32.mrb[0].mxu0
        %v655 = vadd.f32 %v465, %v654
        %v656 = vpop.f32.mrb[0].mxu0
        %v657 = vadd.f32 %v461, %v656
        %v658 = vpop.f32.mrb[0].mxu0
        %v659 = vadd.f32 %v465, %v658
        %660 = vmatprep.mubr.bf16.mxu0 0
        %661 = vmatmul.mubr.bf16.gmra.mrb[0].mxu0 %v432
        %v662 = vpop.f32.mrb[0].mxu0
        %v663 = vadd.f32 %v461, %v662
        %v664 = vpop.f32.mrb[0].mxu0
        %v665 = vadd.f32 %v465, %v664
        %v666 = vpop.f32.mrb[0].mxu0
        %v667 = vadd.f32 %v461, %v666
        %v668 = vpop.f32.mrb[0].mxu0
        %v669 = vadd.f32 %v465, %v668
        %670 = vmatprep.mubr.bf16.mxu0 0
        %671 = vmatmul.mubr.bf16.gmra.mrb[0].mxu0 %v433
        %v672 = vpop.f32.mrb[0].mxu0
        %v673 = vadd.f32 %v461, %v672
        %v674 = vpop.f32.mrb[0].mxu0
        %v675 = vadd.f32 %v465, %v674
        %v676 = vpop.f32.mrb[0].mxu0
        %v677 = vadd.f32 %v461, %v676
        %v678 = vpop.f32.mrb[0].mxu0
        %v679 = vadd.f32 %v465, %v678
        %680 = vmatprep.mubr.bf16.mxu0 0
        %681 = vmatmul.mubr.bf16.gmra.mrb[0].mxu0 %v434
        %v682 = vpop.f32.mrb[0].mxu0
        %v683 = vadd.f32 %v461, %v682
        %v684 = vpop.f32.mrb[0].mxu0
        %v685 = vadd.f32 %v465, %v684
        %v686 = vpop.f32.mrb[0].mxu0
        %v687 = vadd.f32 %v461, %v686
        %v688 = vpop.f32.mrb[0].mxu0
        %v689 = vadd.f32 %v465, %v688
        %690 = vmatprep.mubr.bf16.mxu0 0
        %691 = vmatmul.mubr.bf16.gmra.mrb[0].mxu0 %v435
        %v692 = vpop.f32.mrb[0].mxu0
        %v693 = vadd.f32 %v461, %v692
        %v694 = vpop.f32.mrb[0].mxu0
        %v695 = vadd.f32 %v465, %v694
        %v696 = vpop.f32.mrb[0].mxu0
        %v697 = vadd.f32 %v461, %v696
        %v698 = vpop.f32.mrb[0].mxu0
        %v699 = vadd.f32 %v465, %v698
        %700 = vmatprep.mubr.bf16.mxu0 0
        %701 = vmatmul.mubr.bf16.gmra.mrb[0].mxu0 %v436
        %v702 = vpop.f32.mrb[0].mxu0
        %v703 = vadd.f32 %v461, %v702
        %v704 = vpop.f32.mrb[0].mxu0
        %v705 = vadd.f32 %v465, %v704
        %v706 = vpop.f32.mrb[0].mxu0
        %v707 = vadd.f32 %v461, %v706
        %v708 = vpop.f32.mrb[0].mxu0
        %v709 = vadd.f32 %v465, %v708
        %710 = vmatprep.mubr.bf16.mxu0 0
        %711 = vmatmul.mubr.bf16.gmra.mrb[0].mxu0 %v437
        %v712 = vpop.f32.mrb[0].mxu0
        %v713 = vadd.f32 %v461, %v712
        %v714 = vpop.f32.mrb[0].mxu0
        %v715 = vadd.f32 %v465, %v714
        %v716 = vpop.f32.mrb[0].mxu0
        %v717 = vadd.f32 %v461, %v716
        %v718 = vpop.f32.mrb[0].mxu0
        %v719 = vadd.f32 %v465, %v718
        %720 = vmatprep.mubr.bf16.mxu0 0
        %721 = vmatmul.mubr.bf16.gmra.mrb[0].mxu0 %v438
        %v722 = vpop.f32.mrb[0].mxu0
        %v723 = vadd.f32 %v461, %v722
        %v724 = vpop.f32.mrb[0].mxu0
        %v725 = vadd.f32 %v465, %v724
        %v726 = vpop.f32.mrb[0].mxu0
        %v727 = vadd.f32 %v461, %v726
        %v728 = vpop.f32.mrb[0].mxu0
        %v729 = vadd.f32 %v465, %v728
        %730 = vmatprep.mubr.bf16.mxu0 0
        %731 = vmatmul.mubr.bf16.gmra.mrb[0].mxu0 %v439
        %v732 = vpop.f32.mrb[0].mxu0
        %v733 = vadd.f32 %v461, %v732
        %v734 = vpop.f32.mrb[0].mxu0
        %v735 = vadd.f32 %v465, %v734
        %v736 = vpop.f32.mrb[0].mxu0
        %v737 = vadd.f32 %v461, %v736
        %v738 = vpop.f32.mrb[0].mxu0
        %v739 = vadd.f32 %v465, %v738
        %740 = vdwg.mxu0
        %v741 = vmul.f32 %v583, 0.5
        %v742 = vmul.f32 %v585, 0.5
        %v743 = vmul.f32 %v587, 0.5
        %v744 = vmul.f32 %v589, 0.5
        %v745 = vmul.f32 %v593, 0.5
        %v746 = vmul.f32 %v595, 0.5
        %v747 = vmul.f32 %v597, 0.5
        %v748 = vmul.f32 %v599, 0.5
        %v749 = vmul.f32 %v603, 0.5
        %v750 = vmul.f32 %v605, 0.5
        %v751 = vmul.f32 %v607, 0.5
        %v752 = vmul.f32 %v609, 0.5
        %v753 = vmul.f32 %v613, 0.5
        %v754 = vmul.f32 %v615, 0.5
        %v755 = vmul.f32 %v617, 0.5
        %v756 = vmul.f32 %v619, 0.5
        %v757 = vmul.f32 %v623, 0.5
        %v758 = vmul.f32 %v625, 0.5
        %v759 = vmul.f32 %v627, 0.5
        %v760 = vmul.f32 %v629, 0.5
        %v761 = vmul.f32 %v633, 0.5
        %v762 = vmul.f32 %v635, 0.5
        %v763 = vmul.f32 %v637, 0.5
        %v764 = vmul.f32 %v639, 0.5
        %v765 = vmul.f32 %v643, 0.5
        %v766 = vmul.f32 %v645, 0.5
        %v767 = vmul.f32 %v647, 0.5
        %v768 = vmul.f32 %v649, 0.5
        %v769 = vmul.f32 %v653, 0.5
        %v770 = vmul.f32 %v655, 0.5
        %v771 = vmul.f32 %v657, 0.5
        %v772 = vmul.f32 %v659, 0.5
        %v773 = vmul.f32 %v663, 0.5
        %v774 = vmul.f32 %v665, 0.5
        %v775 = vmul.f32 %v667, 0.5
        %v776 = vmul.f32 %v669, 0.5
        %v777 = vmul.f32 %v673, 0.5
        %v778 = vmul.f32 %v675, 0.5
        %v779 = vmul.f32 %v677, 0.5
        %v780 = vmul.f32 %v679, 0.5
        %v781 = vmul.f32 %v683, 0.5
        %v782 = vmul.f32 %v685, 0.5
        %v783 = vmul.f32 %v687, 0.5
        %v784 = vmul.f32 %v689, 0.5
        %v785 = vmul.f32 %v693, 0.5
        %v786 = vmul.f32 %v695, 0.5
        %v787 = vmul.f32 %v697, 0.5
        %v788 = vmul.f32 %v699, 0.5
        %v789 = vmul.f32 %v703, 0.5
        %v790 = vmul.f32 %v705, 0.5
        %v791 = vmul.f32 %v707, 0.5
        %v792 = vmul.f32 %v709, 0.5
        %v793 = vmul.f32 %v713, 0.5
        %v794 = vmul.f32 %v715, 0.5
        %v795 = vmul.f32 %v717, 0.5
        %v796 = vmul.f32 %v719, 0.5
        %v797 = vmul.f32 %v723, 0.5
        %v798 = vmul.f32 %v725, 0.5
        %v799 = vmul.f32 %v727, 0.5
        %v800 = vmul.f32 %v729, 0.5
        %v801 = vmul.f32 %v733, 0.5
        %v802 = vmul.f32 %v735, 0.5
        %v803 = vmul.f32 %v737, 0.5
        %v804 = vmul.f32 %v739, 0.5
        %v805 = vmul.f32 %v583, 0.044715
        %v806 = vmul.f32 %v585, 0.044715
        %v807 = vmul.f32 %v587, 0.044715
        %v808 = vmul.f32 %v589, 0.044715
        %v809 = vmul.f32 %v593, 0.044715
        %v810 = vmul.f32 %v595, 0.044715
        %v811 = vmul.f32 %v597, 0.044715
        %v812 = vmul.f32 %v599, 0.044715
        %v813 = vmul.f32 %v603, 0.044715
        %v814 = vmul.f32 %v605, 0.044715
        %v815 = vmul.f32 %v607, 0.044715
        %v816 = vmul.f32 %v609, 0.044715
        %v817 = vmul.f32 %v613, 0.044715
        %v818 = vmul.f32 %v615, 0.044715
        %v819 = vmul.f32 %v617, 0.044715
        %v820 = vmul.f32 %v619, 0.044715
        %v821 = vmul.f32 %v623, 0.044715
        %v822 = vmul.f32 %v625, 0.044715
        %v823 = vmul.f32 %v627, 0.044715
        %v824 = vmul.f32 %v629, 0.044715
        %v825 = vmul.f32 %v633, 0.044715
        %v826 = vmul.f32 %v635, 0.044715
        %v827 = vmul.f32 %v637, 0.044715
        %v828 = vmul.f32 %v639, 0.044715
        %v829 = vmul.f32 %v643, 0.044715
        %v830 = vmul.f32 %v645, 0.044715
        %v831 = vmul.f32 %v647, 0.044715
        %v832 = vmul.f32 %v649, 0.044715
        %v833 = vmul.f32 %v653, 0.044715
        %v834 = vmul.f32 %v655, 0.044715
        %v835 = vmul.f32 %v657, 0.044715
        %v836 = vmul.f32 %v659, 0.044715
        %v837 = vmul.f32 %v663, 0.044715
        %v838 = vmul.f32 %v665, 0.044715
        %v839 = vmul.f32 %v667, 0.044715
        %v840 = vmul.f32 %v669, 0.044715
        %v841 = vmul.f32 %v673, 0.044715
        %v842 = vmul.f32 %v675, 0.044715
        %v843 = vmul.f32 %v677, 0.044715
        %v844 = vmul.f32 %v679, 0.044715
        %v845 = vmul.f32 %v683, 0.044715
        %v846 = vmul.f32 %v685, 0.044715
        %v847 = vmul.f32 %v687, 0.044715
        %v848 = vmul.f32 %v689, 0.044715
        %v849 = vmul.f32 %v693, 0.044715
        %v850 = vmul.f32 %v695, 0.044715
        %v851 = vmul.f32 %v697, 0.044715
        %v852 = vmul.f32 %v699, 0.044715
        %v853 = vmul.f32 %v703, 0.044715
        %v854 = vmul.f32 %v705, 0.044715
        %v855 = vmul.f32 %v707, 0.044715
        %v856 = vmul.f32 %v709, 0.044715
        %v857 = vmul.f32 %v713, 0.044715
        %v858 = vmul.f32 %v715, 0.044715
        %v859 = vmul.f32 %v717, 0.044715
        %v860 = vmul.f32 %v719, 0.044715
        %v861 = vmul.f32 %v723, 0.044715
        %v862 = vmul.f32 %v725, 0.044715
        %v863 = vmul.f32 %v727, 0.044715
        %v864 = vmul.f32 %v729, 0.044715
        %v865 = vmul.f32 %v733, 0.044715
        %v866 = vmul.f32 %v735, 0.044715
        %v867 = vmul.f32 %v737, 0.044715
        %v868 = vmul.f32 %v739, 0.044715
        %v869 = vmul.f32 %v805, %v583
        %v870 = vmul.f32 %v806, %v585
        %v871 = vmul.f32 %v807, %v587
        %v872 = vmul.f32 %v808, %v589
        %v873 = vmul.f32 %v809, %v593
        %v874 = vmul.f32 %v810, %v595
        %v875 = vmul.f32 %v811, %v597
        %v876 = vmul.f32 %v812, %v599
        %v877 = vmul.f32 %v813, %v603
        %v878 = vmul.f32 %v814, %v605
        %v879 = vmul.f32 %v815, %v607
        %v880 = vmul.f32 %v816, %v609
        %v881 = vmul.f32 %v817, %v613
        %v882 = vmul.f32 %v818, %v615
        %v883 = vmul.f32 %v819, %v617
        %v884 = vmul.f32 %v820, %v619
        %v885 = vmul.f32 %v821, %v623
        %v886 = vmul.f32 %v822, %v625
        %v887 = vmul.f32 %v823, %v627
        %v888 = vmul.f32 %v824, %v629
        %v889 = vmul.f32 %v825, %v633
        %v890 = vmul.f32 %v826, %v635
        %v891 = vmul.f32 %v827, %v637
        %v892 = vmul.f32 %v828, %v639
        %v893 = vmul.f32 %v829, %v643
        %v894 = vmul.f32 %v830, %v645
        %v895 = vmul.f32 %v831, %v647
        %v896 = vmul.f32 %v832, %v649
        %v897 = vmul.f32 %v833, %v653
        %v898 = vmul.f32 %v834, %v655
        %v899 = vmul.f32 %v835, %v657
        %v900 = vmul.f32 %v836, %v659
        %v901 = vmul.f32 %v837, %v663
        %v902 = vmul.f32 %v838, %v665
        %v903 = vmul.f32 %v839, %v667
        %v904 = vmul.f32 %v840, %v669
        %v905 = vmul.f32 %v841, %v673
        %v906 = vmul.f32 %v842, %v675
        %v907 = vmul.f32 %v843, %v677
        %v908 = vmul.f32 %v844, %v679
        %v909 = vmul.f32 %v845, %v683
        %v910 = vmul.f32 %v846, %v685
        %v911 = vmul.f32 %v847, %v687
        %v912 = vmul.f32 %v848, %v689
        %v913 = vmul.f32 %v849, %v693
        %v914 = vmul.f32 %v850, %v695
        %v915 = vmul.f32 %v851, %v697
        %v916 = vmul.f32 %v852, %v699
        %v917 = vmul.f32 %v853, %v703
        %v918 = vmul.f32 %v854, %v705
        %v919 = vmul.f32 %v855, %v707
        %v920 = vmul.f32 %v856, %v709
        %v921 = vmul.f32 %v857, %v713
        %v922 = vmul.f32 %v858, %v715
        %v923 = vmul.f32 %v859, %v717
        %v924 = vmul.f32 %v860, %v719
        %v925 = vmul.f32 %v861, %v723
        %v926 = vmul.f32 %v862, %v725
        %v927 = vmul.f32 %v863, %v727
        %v928 = vmul.f32 %v864, %v729
        %v929 = vmul.f32 %v865, %v733
        %v930 = vmul.f32 %v866, %v735
        %v931 = vmul.f32 %v867, %v737
        %v932 = vmul.f32 %v868, %v739
        %v933 = vmul.f32 %v869, %v583
        %v934 = vmul.f32 %v870, %v585
        %v935 = vmul.f32 %v871, %v587
        %v936 = vmul.f32 %v872, %v589
        %v937 = vmul.f32 %v873, %v593
        %v938 = vmul.f32 %v874, %v595
        %v939 = vmul.f32 %v875, %v597
        %v940 = vmul.f32 %v876, %v599
        %v941 = vmul.f32 %v877, %v603
        %v942 = vmul.f32 %v878, %v605
        %v943 = vmul.f32 %v879, %v607
        %v944 = vmul.f32 %v880, %v609
        %v945 = vmul.f32 %v881, %v613
        %v946 = vmul.f32 %v882, %v615
        %v947 = vmul.f32 %v883, %v617
        %v948 = vmul.f32 %v884, %v619
        %v949 = vmul.f32 %v885, %v623
        %v950 = vmul.f32 %v886, %v625
        %v951 = vmul.f32 %v887, %v627
        %v952 = vmul.f32 %v888, %v629
        %v953 = vmul.f32 %v889, %v633
        %v954 = vmul.f32 %v890, %v635
        %v955 = vmul.f32 %v891, %v637
        %v956 = vmul.f32 %v892, %v639
        %v957 = vmul.f32 %v893, %v643
        %v958 = vmul.f32 %v894, %v645
        %v959 = vmul.f32 %v895, %v647
        %v960 = vmul.f32 %v896, %v649
        %v961 = vmul.f32 %v897, %v653
        %v962 = vmul.f32 %v898, %v655
        %v963 = vmul.f32 %v899, %v657
        %v964 = vmul.f32 %v900, %v659
        %v965 = vmul.f32 %v901, %v663
        %v966 = vmul.f32 %v902, %v665
        %v967 = vmul.f32 %v903, %v667
        %v968 = vmul.f32 %v904, %v669
        %v969 = vmul.f32 %v905, %v673
        %v970 = vmul.f32 %v906, %v675
        %v971 = vmul.f32 %v907, %v677
        %v972 = vmul.f32 %v908, %v679
        %v973 = vmul.f32 %v909, %v683
        %v974 = vmul.f32 %v910, %v685
        %v975 = vmul.f32 %v911, %v687
        %v976 = vmul.f32 %v912, %v689
        %v977 = vmul.f32 %v913, %v693
        %v978 = vmul.f32 %v914, %v695
        %v979 = vmul.f32 %v915, %v697
        %v980 = vmul.f32 %v916, %v699
        %v981 = vmul.f32 %v917, %v703
        %v982 = vmul.f32 %v918, %v705
        %v983 = vmul.f32 %v919, %v707
        %v984 = vmul.f32 %v920, %v709
        %v985 = vmul.f32 %v921, %v713
        %v986 = vmul.f32 %v922, %v715
        %v987 = vmul.f32 %v923, %v717
        %v988 = vmul.f32 %v924, %v719
        %v989 = vmul.f32 %v925, %v723
        %v990 = vmul.f32 %v926, %v725
        %v991 = vmul.f32 %v927, %v727
        %v992 = vmul.f32 %v928, %v729
        %v993 = vmul.f32 %v929, %v733
        %v994 = vmul.f32 %v930, %v735
        %v995 = vmul.f32 %v931, %v737
        %v996 = vmul.f32 %v932, %v739
        %v997 = vadd.f32 %v583, %v933
        %v998 = vadd.f32 %v585, %v934
        %v999 = vadd.f32 %v587, %v935
        %v1000 = vadd.f32 %v589, %v936
        %v1001 = vadd.f32 %v593, %v937
        %v1002 = vadd.f32 %v595, %v938
        %v1003 = vadd.f32 %v597, %v939
        %v1004 = vadd.f32 %v599, %v940
        %v1005 = vadd.f32 %v603, %v941
        %v1006 = vadd.f32 %v605, %v942
        %v1007 = vadd.f32 %v607, %v943
        %v1008 = vadd.f32 %v609, %v944
        %v1009 = vadd.f32 %v613, %v945
        %v1010 = vadd.f32 %v615, %v946
        %v1011 = vadd.f32 %v617, %v947
        %v1012 = vadd.f32 %v619, %v948
        %v1013 = vadd.f32 %v623, %v949
        %v1014 = vadd.f32 %v625, %v950
        %v1015 = vadd.f32 %v627, %v951
        %v1016 = vadd.f32 %v629, %v952
        %v1017 = vadd.f32 %v633, %v953
        %v1018 = vadd.f32 %v635, %v954
        %v1019 = vadd.f32 %v637, %v955
        %v1020 = vadd.f32 %v639, %v956
        %v1021 = vadd.f32 %v643, %v957
        %v1022 = vadd.f32 %v645, %v958
        %v1023 = vadd.f32 %v647, %v959
        %v1024 = vadd.f32 %v649, %v960
        %v1025 = vadd.f32 %v653, %v961
        %v1026 = vadd.f32 %v655, %v962
        %v1027 = vadd.f32 %v657, %v963
        %v1028 = vadd.f32 %v659, %v964
        %v1029 = vadd.f32 %v663, %v965
        %v1030 = vadd.f32 %v665, %v966
        %v1031 = vadd.f32 %v667, %v967
        %v1032 = vadd.f32 %v669, %v968
        %v1033 = vadd.f32 %v673, %v969
        %v1034 = vadd.f32 %v675, %v970
        %v1035 = vadd.f32 %v677, %v971
        %v1036 = vadd.f32 %v679, %v972
        %v1037 = vadd.f32 %v683, %v973
        %v1038 = vadd.f32 %v685, %v974
        %v1039 = vadd.f32 %v687, %v975
        %v1040 = vadd.f32 %v689, %v976
        %v1041 = vadd.f32 %v693, %v977
        %v1042 = vadd.f32 %v695, %v978
        %v1043 = vadd.f32 %v697, %v979
        %v1044 = vadd.f32 %v699, %v980
        %v1045 = vadd.f32 %v703, %v981
        %v1046 = vadd.f32 %v705, %v982
        %v1047 = vadd.f32 %v707, %v983
        %v1048 = vadd.f32 %v709, %v984
        %v1049 = vadd.f32 %v713, %v985
        %v1050 = vadd.f32 %v715, %v986
        %v1051 = vadd.f32 %v717, %v987
        %v1052 = vadd.f32 %v719, %v988
        %v1053 = vadd.f32 %v723, %v989
        %v1054 = vadd.f32 %v725, %v990
        %v1055 = vadd.f32 %v727, %v991
        %v1056 = vadd.f32 %v729, %v992
        %v1057 = vadd.f32 %v733, %v993
        %v1058 = vadd.f32 %v735, %v994
        %v1059 = vadd.f32 %v737, %v995
        %v1060 = vadd.f32 %v739, %v996
        %v1061 = vmul.f32 %v997, 0.7978846
        %v1062 = vmul.f32 %v998, 0.7978846
        %v1063 = vmul.f32 %v999, 0.7978846
        %v1064 = vmul.f32 %v1000, 0.7978846
        %v1065 = vmul.f32 %v1001, 0.7978846
        %v1066 = vmul.f32 %v1002, 0.7978846
        %v1067 = vmul.f32 %v1003, 0.7978846
        %v1068 = vmul.f32 %v1004, 0.7978846
        %v1069 = vmul.f32 %v1005, 0.7978846
        %v1070 = vmul.f32 %v1006, 0.7978846
        %v1071 = vmul.f32 %v1007, 0.7978846
        %v1072 = vmul.f32 %v1008, 0.7978846
        %v1073 = vmul.f32 %v1009, 0.7978846
        %v1074 = vmul.f32 %v1010, 0.7978846
        %v1075 = vmul.f32 %v1011, 0.7978846
        %v1076 = vmul.f32 %v1012, 0.7978846
        %v1077 = vmul.f32 %v1013, 0.7978846
        %v1078 = vmul.f32 %v1014, 0.7978846
        %v1079 = vmul.f32 %v1015, 0.7978846
        %v1080 = vmul.f32 %v1016, 0.7978846
        %v1081 = vmul.f32 %v1017, 0.7978846
        %v1082 = vmul.f32 %v1018, 0.7978846
        %v1083 = vmul.f32 %v1019, 0.7978846
        %v1084 = vmul.f32 %v1020, 0.7978846
        %v1085 = vmul.f32 %v1021, 0.7978846
        %v1086 = vmul.f32 %v1022, 0.7978846
        %v1087 = vmul.f32 %v1023, 0.7978846
        %v1088 = vmul.f32 %v1024, 0.7978846
        %v1089 = vmul.f32 %v1025, 0.7978846
        %v1090 = vmul.f32 %v1026, 0.7978846
        %v1091 = vmul.f32 %v1027, 0.7978846
        %v1092 = vmul.f32 %v1028, 0.7978846
        %v1093 = vmul.f32 %v1029, 0.7978846
        %v1094 = vmul.f32 %v1030, 0.7978846
        %v1095 = vmul.f32 %v1031, 0.7978846
        %v1096 = vmul.f32 %v1032, 0.7978846
        %v1097 = vmul.f32 %v1033, 0.7978846
        %v1098 = vmul.f32 %v1034, 0.7978846
        %v1099 = vmul.f32 %v1035, 0.7978846
        %v1100 = vmul.f32 %v1036, 0.7978846
        %v1101 = vmul.f32 %v1037, 0.7978846
        %v1102 = vmul.f32 %v1038, 0.7978846
        %v1103 = vmul.f32 %v1039, 0.7978846
        %v1104 = vmul.f32 %v1040, 0.7978846
        %v1105 = vmul.f32 %v1041, 0.7978846
        %v1106 = vmul.f32 %v1042, 0.7978846
        %v1107 = vmul.f32 %v1043, 0.7978846
        %v1108 = vmul.f32 %v1044, 0.7978846
        %v1109 = vmul.f32 %v1045, 0.7978846
        %v1110 = vmul.f32 %v1046, 0.7978846
        %v1111 = vmul.f32 %v1047, 0.7978846
        %v1112 = vmul.f32 %v1048, 0.7978846
        %v1113 = vmul.f32 %v1049, 0.7978846
        %v1114 = vmul.f32 %v1050, 0.7978846
        %v1115 = vmul.f32 %v1051, 0.7978846
        %v1116 = vmul.f32 %v1052, 0.7978846
        %v1117 = vmul.f32 %v1053, 0.7978846
        %v1118 = vmul.f32 %v1054, 0.7978846
        %v1119 = vmul.f32 %v1055, 0.7978846
        %v1120 = vmul.f32 %v1056, 0.7978846
        %v1121 = vmul.f32 %v1057, 0.7978846
        %v1122 = vmul.f32 %v1058, 0.7978846
        %v1123 = vmul.f32 %v1059, 0.7978846
        %v1124 = vmul.f32 %v1060, 0.7978846
        %v1125 = vtanh.pop %v1061
        %v1126 = vtanh.pop %v1062
        %v1127 = vtanh.pop %v1063
        %v1128 = vtanh.pop %v1064
        %v1129 = vtanh.pop %v1065
        %v1130 = vtanh.pop %v1066
        %v1131 = vtanh.pop %v1067
        %v1132 = vtanh.pop %v1068
        %v1133 = vtanh.pop %v1069
        %v1134 = vtanh.pop %v1070
        %v1135 = vtanh.pop %v1071
        %v1136 = vtanh.pop %v1072
        %v1137 = vtanh.pop %v1073
        %v1138 = vtanh.pop %v1074
        %v1139 = vtanh.pop %v1075
        %v1140 = vtanh.pop %v1076
        %v1141 = vtanh.pop %v1077
        %v1142 = vtanh.pop %v1078
        %v1143 = vtanh.pop %v1079
        %v1144 = vtanh.pop %v1080
        %v1145 = vtanh.pop %v1081
        %v1146 = vtanh.pop %v1082
        %v1147 = vtanh.pop %v1083
        %v1148 = vtanh.pop %v1084
        %v1149 = vtanh.pop %v1085
        %v1150 = vtanh.pop %v1086
        %v1151 = vtanh.pop %v1087
        %v1152 = vtanh.pop %v1088
        %v1153 = vtanh.pop %v1089
        %v1154 = vtanh.pop %v1090
        %v1155 = vtanh.pop %v1091
        %v1156 = vtanh.pop %v1092
        %v1157 = vtanh.pop %v1093
        %v1158 = vtanh.pop %v1094
        %v1159 = vtanh.pop %v1095
        %v1160 = vtanh.pop %v1096
        %v1161 = vtanh.pop %v1097
        %v1162 = vtanh.pop %v1098
        %v1163 = vtanh.pop %v1099
        %v1164 = vtanh.pop %v1100
        %v1165 = vtanh.pop %v1101
        %v1166 = vtanh.pop %v1102
        %v1167 = vtanh.pop %v1103
        %v1168 = vtanh.pop %v1104
        %v1169 = vtanh.pop %v1105
        %v1170 = vtanh.pop %v1106
        %v1171 = vtanh.pop %v1107
        %v1172 = vtanh.pop %v1108
        %v1173 = vtanh.pop %v1109
        %v1174 = vtanh.pop %v1110
        %v1175 = vtanh.pop %v1111
        %v1176 = vtanh.pop %v1112
        %v1177 = vtanh.pop %v1113
        %v1178 = vtanh.pop %v1114
        %v1179 = vtanh.pop %v1115
        %v1180 = vtanh.pop %v1116
        %v1181 = vtanh.pop %v1117
        %v1182 = vtanh.pop %v1118
        %v1183 = vtanh.pop %v1119
        %v1184 = vtanh.pop %v1120
        %v1185 = vtanh.pop %v1121
        %v1186 = vtanh.pop %v1122
        %v1187 = vtanh.pop %v1123
        %v1188 = vtanh.pop %v1124
        %v1189 = vadd.f32 %v1125, 1.0
        %v1190 = vadd.f32 %v1126, 1.0
        %v1191 = vadd.f32 %v1127, 1.0
        %v1192 = vadd.f32 %v1128, 1.0
        %v1193 = vadd.f32 %v1129, 1.0
        %v1194 = vadd.f32 %v1130, 1.0
        %v1195 = vadd.f32 %v1131, 1.0
        %v1196 = vadd.f32 %v1132, 1.0
        %v1197 = vadd.f32 %v1133, 1.0
        %v1198 = vadd.f32 %v1134, 1.0
        %v1199 = vadd.f32 %v1135, 1.0
        %v1200 = vadd.f32 %v1136, 1.0
        %v1201 = vadd.f32 %v1137, 1.0
        %v1202 = vadd.f32 %v1138, 1.0
        %v1203 = vadd.f32 %v1139, 1.0
        %v1204 = vadd.f32 %v1140, 1.0
        %v1205 = vadd.f32 %v1141, 1.0
        %v1206 = vadd.f32 %v1142, 1.0
        %v1207 = vadd.f32 %v1143, 1.0
        %v1208 = vadd.f32 %v1144, 1.0
        %v1209 = vadd.f32 %v1145, 1.0
        %v1210 = vadd.f32 %v1146, 1.0
        %v1211 = vadd.f32 %v1147, 1.0
        %v1212 = vadd.f32 %v1148, 1.0
        %v1213 = vadd.f32 %v1149, 1.0
        %v1214 = vadd.f32 %v1150, 1.0
        %v1215 = vadd.f32 %v1151, 1.0
        %v1216 = vadd.f32 %v1152, 1.0
        %v1217 = vadd.f32 %v1153, 1.0
        %v1218 = vadd.f32 %v1154, 1.0
        %v1219 = vadd.f32 %v1155, 1.0
        %v1220 = vadd.f32 %v1156, 1.0
        %v1221 = vadd.f32 %v1157, 1.0
        %v1222 = vadd.f32 %v1158, 1.0
        %v1223 = vadd.f32 %v1159, 1.0
        %v1224 = vadd.f32 %v1160, 1.0
        %v1225 = vadd.f32 %v1161, 1.0
        %v1226 = vadd.f32 %v1162, 1.0
        %v1227 = vadd.f32 %v1163, 1.0
        %v1228 = vadd.f32 %v1164, 1.0
        %v1229 = vadd.f32 %v1165, 1.0
        %v1230 = vadd.f32 %v1166, 1.0
        %v1231 = vadd.f32 %v1167, 1.0
        %v1232 = vadd.f32 %v1168, 1.0
        %v1233 = vadd.f32 %v1169, 1.0
        %v1234 = vadd.f32 %v1170, 1.0
        %v1235 = vadd.f32 %v1171, 1.0
        %v1236 = vadd.f32 %v1172, 1.0
        %v1237 = vadd.f32 %v1173, 1.0
        %v1238 = vadd.f32 %v1174, 1.0
        %v1239 = vadd.f32 %v1175, 1.0
        %v1240 = vadd.f32 %v1176, 1.0
        %v1241 = vadd.f32 %v1177, 1.0
        %v1242 = vadd.f32 %v1178, 1.0
        %v1243 = vadd.f32 %v1179, 1.0
        %v1244 = vadd.f32 %v1180, 1.0
        %v1245 = vadd.f32 %v1181, 1.0
        %v1246 = vadd.f32 %v1182, 1.0
        %v1247 = vadd.f32 %v1183, 1.0
        %v1248 = vadd.f32 %v1184, 1.0
        %v1249 = vadd.f32 %v1185, 1.0
        %v1250 = vadd.f32 %v1186, 1.0
        %v1251 = vadd.f32 %v1187, 1.0
        %v1252 = vadd.f32 %v1188, 1.0
        %v1253 = vmul.f32 %v741, %v1189
        %v1254 = vmul.f32 %v742, %v1190
        %v1255 = vmul.f32 %v743, %v1191
        %v1256 = vmul.f32 %v744, %v1192
        %v1257 = vmul.f32 %v745, %v1193
        %v1258 = vmul.f32 %v746, %v1194
        %v1259 = vmul.f32 %v747, %v1195
        %v1260 = vmul.f32 %v748, %v1196
        %v1261 = vmul.f32 %v749, %v1197
        %v1262 = vmul.f32 %v750, %v1198
        %v1263 = vmul.f32 %v751, %v1199
        %v1264 = vmul.f32 %v752, %v1200
        %v1265 = vmul.f32 %v753, %v1201
        %v1266 = vmul.f32 %v754, %v1202
        %v1267 = vmul.f32 %v755, %v1203
        %v1268 = vmul.f32 %v756, %v1204
        %v1269 = vmul.f32 %v757, %v1205
        %v1270 = vmul.f32 %v758, %v1206
        %v1271 = vmul.f32 %v759, %v1207
        %v1272 = vmul.f32 %v760, %v1208
        %v1273 = vmul.f32 %v761, %v1209
        %v1274 = vmul.f32 %v762, %v1210
        %v1275 = vmul.f32 %v763, %v1211
        %v1276 = vmul.f32 %v764, %v1212
        %v1277 = vmul.f32 %v765, %v1213
        %v1278 = vmul.f32 %v766, %v1214
        %v1279 = vmul.f32 %v767, %v1215
        %v1280 = vmul.f32 %v768, %v1216
        %v1281 = vmul.f32 %v769, %v1217
        %v1282 = vmul.f32 %v770, %v1218
        %v1283 = vmul.f32 %v771, %v1219
        %v1284 = vmul.f32 %v772, %v1220
        %v1285 = vmul.f32 %v773, %v1221
        %v1286 = vmul.f32 %v774, %v1222
        %v1287 = vmul.f32 %v775, %v1223
        %v1288 = vmul.f32 %v776, %v1224
        %v1289 = vmul.f32 %v777, %v1225
        %v1290 = vmul.f32 %v778, %v1226
        %v1291 = vmul.f32 %v779, %v1227
        %v1292 = vmul.f32 %v780, %v1228
        %v1293 = vmul.f32 %v781, %v1229
        %v1294 = vmul.f32 %v782, %v1230
        %v1295 = vmul.f32 %v783, %v1231
        %v1296 = vmul.f32 %v784, %v1232
        %v1297 = vmul.f32 %v785, %v1233
        %v1298 = vmul.f32 %v786, %v1234
        %v1299 = vmul.f32 %v787, %v1235
        %v1300 = vmul.f32 %v788, %v1236
        %v1301 = vmul.f32 %v789, %v1237
        %v1302 = vmul.f32 %v790, %v1238
        %v1303 = vmul.f32 %v791, %v1239
        %v1304 = vmul.f32 %v792, %v1240
        %v1305 = vmul.f32 %v793, %v1241
        %v1306 = vmul.f32 %v794, %v1242
        %v1307 = vmul.f32 %v795, %v1243
        %v1308 = vmul.f32 %v796, %v1244
        %v1309 = vmul.f32 %v797, %v1245
        %v1310 = vmul.f32 %v798, %v1246
        %v1311 = vmul.f32 %v799, %v1247
        %v1312 = vmul.f32 %v800, %v1248
        %v1313 = vmul.f32 %v801, %v1249
        %v1314 = vmul.f32 %v802, %v1250
        %v1315 = vmul.f32 %v803, %v1251
        %v1316 = vmul.f32 %v804, %v1252
        %v1317 = vld [vmem:[#allocation2] sm:$0xff]
        %v1318 = vld [vmem:[#allocation2 + $0x8] sm:$0xff]
        %v1319 = vld [vmem:[#allocation2 + $0x10] sm:$0xff]
        %v1320 = vld [vmem:[#allocation2 + $0x18] sm:$0xff]
        %v1321 = vld [vmem:[#allocation2 + $0x20] sm:$0xff]
        %v1322 = vld [vmem:[#allocation2 + $0x28] sm:$0xff]
        %v1323 = vld [vmem:[#allocation2 + $0x30] sm:$0xff]
        %v1324 = vld [vmem:[#allocation2 + $0x38] sm:$0xff]
        %v1325 = vld [vmem:[#allocation2 + $0x40] sm:$0xff]
        %v1326 = vld [vmem:[#allocation2 + $0x48] sm:$0xff]
        %v1327 = vld [vmem:[#allocation2 + $0x50] sm:$0xff]
        %v1328 = vld [vmem:[#allocation2 + $0x58] sm:$0xff]
        %v1329 = vld [vmem:[#allocation2 + $0x60] sm:$0xff]
        %v1330 = vld [vmem:[#allocation2 + $0x68] sm:$0xff]
        %v1331 = vld [vmem:[#allocation2 + $0x70] sm:$0xff]
        %v1332 = vld [vmem:[#allocation2 + $0x78] sm:$0xff]
        %v1333 = vld [vmem:[#allocation2 + $0x80] sm:$0xff]
        %v1334 = vld [vmem:[#allocation2 + $0x88] sm:$0xff]
        %v1335 = vld [vmem:[#allocation2 + $0x90] sm:$0xff]
        %v1336 = vld [vmem:[#allocation2 + $0x98] sm:$0xff]
        %v1337 = vld [vmem:[#allocation2 + $0xa0] sm:$0xff]
        %v1338 = vld [vmem:[#allocation2 + $0xa8] sm:$0xff]
        %v1339 = vld [vmem:[#allocation2 + $0xb0] sm:$0xff]
        %v1340 = vld [vmem:[#allocation2 + $0xb8] sm:$0xff]
        %v1341 = vld [vmem:[#allocation2 + $0xc0] sm:$0xff]
        %v1342 = vld [vmem:[#allocation2 + $0xc8] sm:$0xff]
        %v1343 = vld [vmem:[#allocation2 + $0xd0] sm:$0xff]
        %v1344 = vld [vmem:[#allocation2 + $0xd8] sm:$0xff]
        %v1345 = vld [vmem:[#allocation2 + $0xe0] sm:$0xff]
        %v1346 = vld [vmem:[#allocation2 + $0xe8] sm:$0xff]
        %v1347 = vld [vmem:[#allocation2 + $0xf0] sm:$0xff]
        %v1348 = vld [vmem:[#allocation2 + $0xf8] sm:$0xff]
        %v1349 = vpack.c.bf16 %v1255, %v1253
        %v1350 = vpack.c.bf16 %v1256, %v1254
        %v1351 = vpack.c.bf16 %v1259, %v1257
        %v1352 = vpack.c.bf16 %v1260, %v1258
        %v1353 = vpack.c.bf16 %v1263, %v1261
        %v1354 = vpack.c.bf16 %v1264, %v1262
        %v1355 = vpack.c.bf16 %v1267, %v1265
        %v1356 = vpack.c.bf16 %v1268, %v1266
        %v1357 = vpack.c.bf16 %v1271, %v1269
        %v1358 = vpack.c.bf16 %v1272, %v1270
        %v1359 = vpack.c.bf16 %v1275, %v1273
        %v1360 = vpack.c.bf16 %v1276, %v1274
        %v1361 = vpack.c.bf16 %v1279, %v1277
        %v1362 = vpack.c.bf16 %v1280, %v1278
        %v1363 = vpack.c.bf16 %v1283, %v1281
        %v1364 = vpack.c.bf16 %v1284, %v1282
        %v1365 = vpack.c.bf16 %v1287, %v1285
        %v1366 = vpack.c.bf16 %v1288, %v1286
        %v1367 = vpack.c.bf16 %v1291, %v1289
        %v1368 = vpack.c.bf16 %v1292, %v1290
        %v1369 = vpack.c.bf16 %v1295, %v1293
        %v1370 = vpack.c.bf16 %v1296, %v1294
        %v1371 = vpack.c.bf16 %v1299, %v1297
        %v1372 = vpack.c.bf16 %v1300, %v1298
        %v1373 = vpack.c.bf16 %v1303, %v1301
        %v1374 = vpack.c.bf16 %v1304, %v1302
        %v1375 = vpack.c.bf16 %v1307, %v1305
        %v1376 = vpack.c.bf16 %v1308, %v1306
        %v1377 = vpack.c.bf16 %v1311, %v1309
        %v1378 = vpack.c.bf16 %v1312, %v1310
        %v1379 = vpack.c.bf16 %v1315, %v1313
        %v1380 = vpack.c.bf16 %v1316, %v1314
        %v1381 = vld [vmem:[%s305] sm:$0xf]
        %v1382 = vld [vmem:[%s305 + $0x4] sm:$0xf]
        %v1383 = vld [vmem:[%s305 + $0x8] sm:$0xf]
        %v1384 = vld [vmem:[%s305 + $0xc] sm:$0xf]
        %v1385 = vld [vmem:[%s305 + $0x10] sm:$0xf]
        %v1386 = vld [vmem:[%s305 + $0x14] sm:$0xf]
        %v1387 = vld [vmem:[%s305 + $0x18] sm:$0xf]
        %v1388 = vld [vmem:[%s305 + $0x1c] sm:$0xf]
        %v1389 = vld [vmem:[%s305 + $0x20] sm:$0xf]
        %v1390 = vld [vmem:[%s305 + $0x24] sm:$0xf]
        %v1391 = vld [vmem:[%s305 + $0x28] sm:$0xf]
        %v1392 = vld [vmem:[%s305 + $0x2c] sm:$0xf]
        %v1393 = vld [vmem:[%s305 + $0x30] sm:$0xf]
        %v1394 = vld [vmem:[%s305 + $0x34] sm:$0xf]
        %v1395 = vld [vmem:[%s305 + $0x38] sm:$0xf]
        %v1396 = vld [vmem:[%s305 + $0x3c] sm:$0xf]
        %v1397 = vld [vmem:[%s305 + $0x40] sm:$0xf]
        %v1398 = vld [vmem:[%s305 + $0x44] sm:$0xf]
        %v1399 = vld [vmem:[%s305 + $0x48] sm:$0xf]
        %v1400 = vld [vmem:[%s305 + $0x4c] sm:$0xf]
        %v1401 = vld [vmem:[%s305 + $0x50] sm:$0xf]
        %v1402 = vld [vmem:[%s305 + $0x54] sm:$0xf]
        %v1403 = vld [vmem:[%s305 + $0x58] sm:$0xf]
        %v1404 = vld [vmem:[%s305 + $0x5c] sm:$0xf]
        %v1405 = vld [vmem:[%s305 + $0x60] sm:$0xf]
        %v1406 = vld [vmem:[%s305 + $0x64] sm:$0xf]
        %v1407 = vld [vmem:[%s305 + $0x68] sm:$0xf]
        %v1408 = vld [vmem:[%s305 + $0x6c] sm:$0xf]
        %v1409 = vld [vmem:[%s305 + $0x70] sm:$0xf]
        %v1410 = vld [vmem:[%s305 + $0x74] sm:$0xf]
        %v1411 = vld [vmem:[%s305 + $0x78] sm:$0xf]
        %v1412 = vld [vmem:[%s305 + $0x7c] sm:$0xf]
        %v1445 = vunpack.c.l.b16 %v1381
        %v1446 = vunpack.c.l.b16 %v1382
        %v1447 = vunpack.c.l.b16 %v1383
        %v1448 = vunpack.c.l.b16 %v1384
        %v1449 = vunpack.c.l.b16 %v1385
        %v1450 = vunpack.c.l.b16 %v1386
        %v1451 = vunpack.c.l.b16 %v1387
        %v1452 = vunpack.c.l.b16 %v1388
        %v1453 = vunpack.c.l.b16 %v1389
        %v1454 = vunpack.c.l.b16 %v1390
        %v1455 = vunpack.c.l.b16 %v1391
        %v1456 = vunpack.c.l.b16 %v1392
        %v1457 = vunpack.c.l.b16 %v1393
        %v1458 = vunpack.c.l.b16 %v1394
        %v1459 = vunpack.c.l.b16 %v1395
        %v1460 = vunpack.c.l.b16 %v1396
        %v1461 = vunpack.c.l.b16 %v1397
        %v1462 = vunpack.c.l.b16 %v1398
        %v1463 = vunpack.c.l.b16 %v1399
        %v1464 = vunpack.c.l.b16 %v1400
        %v1465 = vunpack.c.l.b16 %v1401
        %v1466 = vunpack.c.l.b16 %v1402
        %v1467 = vunpack.c.l.b16 %v1403
        %v1468 = vunpack.c.l.b16 %v1404
        %v1469 = vunpack.c.l.b16 %v1405
        %v1470 = vunpack.c.l.b16 %v1406
        %v1471 = vunpack.c.l.b16 %v1407
        %v1472 = vunpack.c.l.b16 %v1408
        %v1473 = vunpack.c.l.b16 %v1409
        %v1474 = vunpack.c.l.b16 %v1410
        %v1475 = vunpack.c.l.b16 %v1411
        %v1476 = vunpack.c.l.b16 %v1412
        %v1477 = vpack.c.b16 %v1446, %v1445
        %v1478 = vpack.c.b16 %v1448, %v1447
        %v1479 = vpack.c.b16 %v1450, %v1449
        %v1480 = vpack.c.b16 %v1452, %v1451
        %v1481 = vpack.c.b16 %v1454, %v1453
        %v1482 = vpack.c.b16 %v1456, %v1455
        %v1483 = vpack.c.b16 %v1458, %v1457
        %v1484 = vpack.c.b16 %v1460, %v1459
        %v1485 = vpack.c.b16 %v1462, %v1461
        %v1486 = vpack.c.b16 %v1464, %v1463
        %v1487 = vpack.c.b16 %v1466, %v1465
        %v1488 = vpack.c.b16 %v1468, %v1467
        %v1489 = vpack.c.b16 %v1470, %v1469
        %v1490 = vpack.c.b16 %v1472, %v1471
        %v1491 = vpack.c.b16 %v1474, %v1473
        %v1492 = vpack.c.b16 %v1476, %v1475
        %1509 = vmatprep.subr.bf16.mxu0 0
        %1510 = vmatpush1.bf16.msra.mxu0 %v1477
        %1511 = vmatprep.subr.bf16.mxu0 0
        %1512 = vmatpush1.bf16.msra.mxu0 %v1478
        %1513 = vmatprep.subr.bf16.mxu0 0
        %1514 = vmatpush1.bf16.msra.mxu0 %v1479
        %1515 = vmatprep.subr.bf16.mxu0 0
        %1516 = vmatpush1.bf16.msra.mxu0 %v1480
        %1517 = vmatprep.subr.bf16.mxu0 0
        %1518 = vmatpush1.bf16.msra.mxu0 %v1481
        %1519 = vmatprep.subr.bf16.mxu0 0
        %1520 = vmatpush1.bf16.msra.mxu0 %v1482
        %1521 = vmatprep.subr.bf16.mxu0 0
        %1522 = vmatpush1.bf16.msra.mxu0 %v1483
        %1523 = vmatprep.subr.bf16.mxu0 0
        %1524 = vmatpush1.bf16.msra.mxu0 %v1484
        %1525 = vmatprep.subr.bf16.mxu0 0
        %1526 = vmatpush1.bf16.msra.mxu0 %v1485
        %1527 = vmatprep.subr.bf16.mxu0 0
        %1528 = vmatpush1.bf16.msra.mxu0 %v1486
        %1529 = vmatprep.subr.bf16.mxu0 0
        %1530 = vmatpush1.bf16.msra.mxu0 %v1487
        %1531 = vmatprep.subr.bf16.mxu0 0
        %1532 = vmatpush1.bf16.msra.mxu0 %v1488
        %1533 = vmatprep.subr.bf16.mxu0 0
        %1534 = vmatpush1.bf16.msra.mxu0 %v1489
        %1535 = vmatprep.subr.bf16.mxu0 0
        %1536 = vmatpush1.bf16.msra.mxu0 %v1490
        %1537 = vmatprep.subr.bf16.mxu0 0
        %1538 = vmatpush1.bf16.msra.mxu0 %v1491
        %1539 = vmatprep.subr.bf16.mxu0 0
        %1540 = vmatpush1.bf16.msra.mxu0 %v1492
        %1541 = vmatprep.mubr.bf16.mxu0 %v1350
        %1542 = vmatmul.mubr.bf16.gmra.mrb[0].mxu0 %v1349
        %v1543 = vpop.f32.mrb[0].mxu0
        %v1544 = vadd.f32 0.0, %v1543
        %v1545 = vpop.f32.mrb[0].mxu0
        %v1546 = vpop.f32.mrb[0].mxu0
        %v1547 = vadd.f32 0.0, %v1546
        %v1548 = vpop.f32.mrb[0].mxu0
        %1549 = vmatprep.mubr.bf16.mxu0 %v1352
        %1550 = vmatmul.mubr.bf16.gmra.mrb[0].mxu0 %v1351
        %v1551 = vpop.f32.mrb[0].mxu0
        %v1552 = vadd.f32 0.0, %v1551
        %v1553 = vpop.f32.mrb[0].mxu0
        %v1554 = vpop.f32.mrb[0].mxu0
        %v1555 = vadd.f32 0.0, %v1554
        %v1556 = vpop.f32.mrb[0].mxu0
        %1557 = vmatprep.mubr.bf16.mxu0 %v1354
        %1558 = vmatmul.mubr.bf16.gmra.mrb[0].mxu0 %v1353
        %v1559 = vpop.f32.mrb[0].mxu0
        %v1560 = vadd.f32 0.0, %v1559
        %v1561 = vpop.f32.mrb[0].mxu0
        %v1562 = vpop.f32.mrb[0].mxu0
        %v1563 = vadd.f32 0.0, %v1562
        %v1564 = vpop.f32.mrb[0].mxu0
        %1565 = vmatprep.mubr.bf16.mxu0 %v1356
        %1566 = vmatmul.mubr.bf16.gmra.mrb[0].mxu0 %v1355
        %v1567 = vpop.f32.mrb[0].mxu0
        %v1568 = vadd.f32 0.0, %v1567
        %v1569 = vpop.f32.mrb[0].mxu0
        %v1570 = vpop.f32.mrb[0].mxu0
        %v1571 = vadd.f32 0.0, %v1570
        %v1572 = vpop.f32.mrb[0].mxu0
        %1573 = vmatprep.mubr.bf16.mxu0 %v1358
        %1574 = vmatmul.mubr.bf16.gmra.mrb[0].mxu0 %v1357
        %v1575 = vpop.f32.mrb[0].mxu0
        %v1576 = vadd.f32 0.0, %v1575
        %v1577 = vpop.f32.mrb[0].mxu0
        %v1578 = vpop.f32.mrb[0].mxu0
        %v1579 = vadd.f32 0.0, %v1578
        %v1580 = vpop.f32.mrb[0].mxu0
        %1581 = vmatprep.mubr.bf16.mxu0 %v1360
        %1582 = vmatmul.mubr.bf16.gmra.mrb[0].mxu0 %v1359
        %v1583 = vpop.f32.mrb[0].mxu0
        %v1584 = vadd.f32 0.0, %v1583
        %v1585 = vpop.f32.mrb[0].mxu0
        %v1586 = vpop.f32.mrb[0].mxu0
        %v1587 = vadd.f32 0.0, %v1586
        %v1588 = vpop.f32.mrb[0].mxu0
        %1589 = vmatprep.mubr.bf16.mxu0 %v1362
        %1590 = vmatmul.mubr.bf16.gmra.mrb[0].mxu0 %v1361
        %v1591 = vpop.f32.mrb[0].mxu0
        %v1592 = vadd.f32 0.0, %v1591
        %v1593 = vpop.f32.mrb[0].mxu0
        %v1594 = vpop.f32.mrb[0].mxu0
        %v1595 = vadd.f32 0.0, %v1594
        %v1596 = vpop.f32.mrb[0].mxu0
        %1597 = vmatprep.mubr.bf16.mxu0 %v1364
        %1598 = vmatmul.mubr.bf16.gmra.mrb[0].mxu0 %v1363
        %v1599 = vpop.f32.mrb[0].mxu0
        %v1600 = vadd.f32 0.0, %v1599
        %v1601 = vpop.f32.mrb[0].mxu0
        %v1602 = vpop.f32.mrb[0].mxu0
        %v1603 = vadd.f32 0.0, %v1602
        %v1604 = vpop.f32.mrb[0].mxu0
        %1605 = vmatprep.mubr.bf16.mxu0 %v1366
        %1606 = vmatmul.mubr.bf16.gmra.mrb[0].mxu0 %v1365
        %v1607 = vpop.f32.mrb[0].mxu0
        %v1608 = vadd.f32 0.0, %v1607
        %v1609 = vpop.f32.mrb[0].mxu0
        %v1610 = vpop.f32.mrb[0].mxu0
        %v1611 = vadd.f32 0.0, %v1610
        %v1612 = vpop.f32.mrb[0].mxu0
        %1613 = vmatprep.mubr.bf16.mxu0 %v1368
        %1614 = vmatmul.mubr.bf16.gmra.mrb[0].mxu0 %v1367
        %v1615 = vpop.f32.mrb[0].mxu0
        %v1616 = vadd.f32 0.0, %v1615
        %v1617 = vpop.f32.mrb[0].mxu0
        %v1618 = vpop.f32.mrb[0].mxu0
        %v1619 = vadd.f32 0.0, %v1618
        %v1620 = vpop.f32.mrb[0].mxu0
        %1621 = vmatprep.mubr.bf16.mxu0 %v1370
        %1622 = vmatmul.mubr.bf16.gmra.mrb[0].mxu0 %v1369
        %v1623 = vpop.f32.mrb[0].mxu0
        %v1624 = vadd.f32 0.0, %v1623
        %v1625 = vpop.f32.mrb[0].mxu0
        %v1626 = vpop.f32.mrb[0].mxu0
        %v1627 = vadd.f32 0.0, %v1626
        %v1628 = vpop.f32.mrb[0].mxu0
        %1629 = vmatprep.mubr.bf16.mxu0 %v1372
        %1630 = vmatmul.mubr.bf16.gmra.mrb[0].mxu0 %v1371
        %v1631 = vpop.f32.mrb[0].mxu0
        %v1632 = vadd.f32 0.0, %v1631
        %v1633 = vpop.f32.mrb[0].mxu0
        %v1634 = vpop.f32.mrb[0].mxu0
        %v1635 = vadd.f32 0.0, %v1634
        %v1636 = vpop.f32.mrb[0].mxu0
        %1637 = vmatprep.mubr.bf16.mxu0 %v1374
        %1638 = vmatmul.mubr.bf16.gmra.mrb[0].mxu0 %v1373
        %v1639 = vpop.f32.mrb[0].mxu0
        %v1640 = vadd.f32 0.0, %v1639
        %v1641 = vpop.f32.mrb[0].mxu0
        %v1642 = vpop.f32.mrb[0].mxu0
        %v1643 = vadd.f32 0.0, %v1642
        %v1644 = vpop.f32.mrb[0].mxu0
        %1645 = vmatprep.mubr.bf16.mxu0 %v1376
        %1646 = vmatmul.mubr.bf16.gmra.mrb[0].mxu0 %v1375
        %v1647 = vpop.f32.mrb[0].mxu0
        %v1648 = vadd.f32 0.0, %v1647
        %v1649 = vpop.f32.mrb[0].mxu0
        %v1650 = vpop.f32.mrb[0].mxu0
        %v1651 = vadd.f32 0.0, %v1650
        %v1652 = vpop.f32.mrb[0].mxu0
        %1653 = vmatprep.mubr.bf16.mxu0 %v1378
        %1654 = vmatmul.mubr.bf16.gmra.mrb[0].mxu0 %v1377
        %v1655 = vpop.f32.mrb[0].mxu0
        %v1656 = vadd.f32 0.0, %v1655
        %v1657 = vpop.f32.mrb[0].mxu0
        %v1658 = vpop.f32.mrb[0].mxu0
        %v1659 = vadd.f32 0.0, %v1658
        %v1660 = vpop.f32.mrb[0].mxu0
        %1661 = vmatprep.mubr.bf16.mxu0 %v1380
        %1662 = vmatmul.mubr.bf16.gmra.mrb[0].mxu0 %v1379
        %v1663 = vpop.f32.mrb[0].mxu0
        %v1664 = vadd.f32 0.0, %v1663
        %v1665 = vpop.f32.mrb[0].mxu0
        %v1666 = vpop.f32.mrb[0].mxu0
        %v1667 = vadd.f32 0.0, %v1666
        %v1668 = vpop.f32.mrb[0].mxu0
        %1669 = vdwg.mxu0
        %v1670 = vadd.f32 %v1317, %v1544
        %v1671 = vadd.f32 %v1318, %v1547
        %v1672 = vadd.f32 %v1319, %v1552
        %v1673 = vadd.f32 %v1320, %v1555
        %v1674 = vadd.f32 %v1321, %v1560
        %v1675 = vadd.f32 %v1322, %v1563
        %v1676 = vadd.f32 %v1323, %v1568
        %v1677 = vadd.f32 %v1324, %v1571
        %v1678 = vadd.f32 %v1325, %v1576
        %v1679 = vadd.f32 %v1326, %v1579
        %v1680 = vadd.f32 %v1327, %v1584
        %v1681 = vadd.f32 %v1328, %v1587
        %v1682 = vadd.f32 %v1329, %v1592
        %v1683 = vadd.f32 %v1330, %v1595
        %v1684 = vadd.f32 %v1331, %v1600
        %v1685 = vadd.f32 %v1332, %v1603
        %v1686 = vadd.f32 %v1333, %v1608
        %v1687 = vadd.f32 %v1334, %v1611
        %v1688 = vadd.f32 %v1335, %v1616
        %v1689 = vadd.f32 %v1336, %v1619
        %v1690 = vadd.f32 %v1337, %v1624
        %v1691 = vadd.f32 %v1338, %v1627
        %v1692 = vadd.f32 %v1339, %v1632
        %v1693 = vadd.f32 %v1340, %v1635
        %v1694 = vadd.f32 %v1341, %v1640
        %v1695 = vadd.f32 %v1342, %v1643
        %v1696 = vadd.f32 %v1343, %v1648
        %v1697 = vadd.f32 %v1344, %v1651
        %v1698 = vadd.f32 %v1345, %v1656
        %v1699 = vadd.f32 %v1346, %v1659
        %v1700 = vadd.f32 %v1347, %v1664
        %v1701 = vadd.f32 %v1348, %v1667
        %1702 = vst [vmem:[#allocation2] sm:$0xff] %v1670
        %1703 = vst [vmem:[#allocation2 + $0x8] sm:$0xff] %v1671
        %1704 = vst [vmem:[#allocation2 + $0x10] sm:$0xff] %v1672
        %1705 = vst [vmem:[#allocation2 + $0x18] sm:$0xff] %v1673
        %1706 = vst [vmem:[#allocation2 + $0x20] sm:$0xff] %v1674
        %1707 = vst [vmem:[#allocation2 + $0x28] sm:$0xff] %v1675
        %1708 = vst [vmem:[#allocation2 + $0x30] sm:$0xff] %v1676
        %1709 = vst [vmem:[#allocation2 + $0x38] sm:$0xff] %v1677
        %1710 = vst [vmem:[#allocation2 + $0x40] sm:$0xff] %v1678
        %1711 = vst [vmem:[#allocation2 + $0x48] sm:$0xff] %v1679
        %1712 = vst [vmem:[#allocation2 + $0x50] sm:$0xff] %v1680
        %1713 = vst [vmem:[#allocation2 + $0x58] sm:$0xff] %v1681
        %1714 = vst [vmem:[#allocation2 + $0x60] sm:$0xff] %v1682
        %1715 = vst [vmem:[#allocation2 + $0x68] sm:$0xff] %v1683
        %1716 = vst [vmem:[#allocation2 + $0x70] sm:$0xff] %v1684
        %1717 = vst [vmem:[#allocation2 + $0x78] sm:$0xff] %v1685
        %1718 = vst [vmem:[#allocation2 + $0x80] sm:$0xff] %v1686
        %1719 = vst [vmem:[#allocation2 + $0x88] sm:$0xff] %v1687
        %1720 = vst [vmem:[#allocation2 + $0x90] sm:$0xff] %v1688
        %1721 = vst [vmem:[#allocation2 + $0x98] sm:$0xff] %v1689
        %1722 = vst [vmem:[#allocation2 + $0xa0] sm:$0xff] %v1690
        %1723 = vst [vmem:[#allocation2 + $0xa8] sm:$0xff] %v1691
        %1724 = vst [vmem:[#allocation2 + $0xb0] sm:$0xff] %v1692
        %1725 = vst [vmem:[#allocation2 + $0xb8] sm:$0xff] %v1693
        %1726 = vst [vmem:[#allocation2 + $0xc0] sm:$0xff] %v1694
        %1727 = vst [vmem:[#allocation2 + $0xc8] sm:$0xff] %v1695
        %1728 = vst [vmem:[#allocation2 + $0xd0] sm:$0xff] %v1696
        %1729 = vst [vmem:[#allocation2 + $0xd8] sm:$0xff] %v1697
        %1730 = vst [vmem:[#allocation2 + $0xe0] sm:$0xff] %v1698
        %1731 = vst [vmem:[#allocation2 + $0xe8] sm:$0xff] %v1699
        %1732 = vst [vmem:[#allocation2 + $0xf0] sm:$0xff] %v1700
        %1733 = vst [vmem:[#allocation2 + $0xf8] sm:$0xff] %v1701
        %p1734 = scmp.eq.s32.totalorder %s30, 1
        // Predicated region
        $region57: #{tpu_custom_call.1} parent=39 // pred_check
          %p1735 = pneg %p1734
        $region58: #{tpu_custom_call.1} parent=39 // pred_check_branch
          %1737 = sbr.rel (%p1735) target = $region60
        $region59: #{tpu_custom_call.1} parent=39 // pred_region
          %v1738 = vld [vmem:[#allocation2] sm:$0xff]
          %v1739 = vld [vmem:[#allocation2 + $0x8] sm:$0xff]
          %v1740 = vld [vmem:[#allocation2 + $0x10] sm:$0xff]
          %v1741 = vld [vmem:[#allocation2 + $0x18] sm:$0xff]
          %v1742 = vld [vmem:[#allocation2 + $0x20] sm:$0xff]
          %v1743 = vld [vmem:[#allocation2 + $0x28] sm:$0xff]
          %v1744 = vld [vmem:[#allocation2 + $0x30] sm:$0xff]
          %v1745 = vld [vmem:[#allocation2 + $0x38] sm:$0xff]
          %v1746 = vld [vmem:[#allocation2 + $0x40] sm:$0xff]
          %v1747 = vld [vmem:[#allocation2 + $0x48] sm:$0xff]
          %v1748 = vld [vmem:[#allocation2 + $0x50] sm:$0xff]
          %v1749 = vld [vmem:[#allocation2 + $0x58] sm:$0xff]
          %v1750 = vld [vmem:[#allocation2 + $0x60] sm:$0xff]
          %v1751 = vld [vmem:[#allocation2 + $0x68] sm:$0xff]
          %v1752 = vld [vmem:[#allocation2 + $0x70] sm:$0xff]
          %v1753 = vld [vmem:[#allocation2 + $0x78] sm:$0xff]
          %v1754 = vld [vmem:[#allocation2 + $0x80] sm:$0xff]
          %v1755 = vld [vmem:[#allocation2 + $0x88] sm:$0xff]
          %v1756 = vld [vmem:[#allocation2 + $0x90] sm:$0xff]
          %v1757 = vld [vmem:[#allocation2 + $0x98] sm:$0xff]
          %v1758 = vld [vmem:[#allocation2 + $0xa0] sm:$0xff]
          %v1759 = vld [vmem:[#allocation2 + $0xa8] sm:$0xff]
          %v1760 = vld [vmem:[#allocation2 + $0xb0] sm:$0xff]
          %v1761 = vld [vmem:[#allocation2 + $0xb8] sm:$0xff]
          %v1762 = vld [vmem:[#allocation2 + $0xc0] sm:$0xff]
          %v1763 = vld [vmem:[#allocation2 + $0xc8] sm:$0xff]
          %v1764 = vld [vmem:[#allocation2 + $0xd0] sm:$0xff]
          %v1765 = vld [vmem:[#allocation2 + $0xd8] sm:$0xff]
          %v1766 = vld [vmem:[#allocation2 + $0xe0] sm:$0xff]
          %v1767 = vld [vmem:[#allocation2 + $0xe8] sm:$0xff]
          %v1768 = vld [vmem:[#allocation2 + $0xf0] sm:$0xff]
          %v1769 = vld [vmem:[#allocation2 + $0xf8] sm:$0xff]
          %v1770 = vld [vmem:[%s4] sm:$0x1]
          %v1772 = vlaneseq
          %v1773 = vshrl.u32 %v1772, 7
          %v1774 = vsub.s32 0, %v1773
          %v1775 = vrot.slane %v1770, %v1774
          %v1777 = vadd.f32 %v1738, %v1775
          %v1778 = vadd.f32 %v1739, %v1775
          %v1779 = vadd.f32 %v1740, %v1775
          %v1780 = vadd.f32 %v1741, %v1775
          %v1781 = vadd.f32 %v1742, %v1775
          %v1782 = vadd.f32 %v1743, %v1775
          %v1783 = vadd.f32 %v1744, %v1775
          %v1784 = vadd.f32 %v1745, %v1775
          %v1785 = vadd.f32 %v1746, %v1775
          %v1786 = vadd.f32 %v1747, %v1775
          %v1787 = vadd.f32 %v1748, %v1775
          %v1788 = vadd.f32 %v1749, %v1775
          %v1789 = vadd.f32 %v1750, %v1775
          %v1790 = vadd.f32 %v1751, %v1775
          %v1791 = vadd.f32 %v1752, %v1775
          %v1792 = vadd.f32 %v1753, %v1775
          %v1793 = vadd.f32 %v1754, %v1775
          %v1794 = vadd.f32 %v1755, %v1775
          %v1795 = vadd.f32 %v1756, %v1775
          %v1796 = vadd.f32 %v1757, %v1775
          %v1797 = vadd.f32 %v1758, %v1775
          %v1798 = vadd.f32 %v1759, %v1775
          %v1799 = vadd.f32 %v1760, %v1775
          %v1800 = vadd.f32 %v1761, %v1775
          %v1801 = vadd.f32 %v1762, %v1775
          %v1802 = vadd.f32 %v1763, %v1775
          %v1803 = vadd.f32 %v1764, %v1775
          %v1804 = vadd.f32 %v1765, %v1775
          %v1805 = vadd.f32 %v1766, %v1775
          %v1806 = vadd.f32 %v1767, %v1775
          %v1807 = vadd.f32 %v1768, %v1775
          %v1808 = vadd.f32 %v1769, %v1775
          %v1809 = vpack.c.bf16 %v1778, %v1777
          %v1810 = vpack.c.bf16 %v1780, %v1779
          %v1811 = vpack.c.bf16 %v1782, %v1781
          %v1812 = vpack.c.bf16 %v1784, %v1783
          %v1813 = vpack.c.bf16 %v1786, %v1785
          %v1814 = vpack.c.bf16 %v1788, %v1787
          %v1815 = vpack.c.bf16 %v1790, %v1789
          %v1816 = vpack.c.bf16 %v1792, %v1791
          %v1817 = vpack.c.bf16 %v1794, %v1793
          %v1818 = vpack.c.bf16 %v1796, %v1795
          %v1819 = vpack.c.bf16 %v1798, %v1797
          %v1820 = vpack.c.bf16 %v1800, %v1799
          %v1821 = vpack.c.bf16 %v1802, %v1801
          %v1822 = vpack.c.bf16 %v1804, %v1803
          %v1823 = vpack.c.bf16 %v1806, %v1805
          %v1824 = vpack.c.bf16 %v1808, %v1807
          %v1841 = vunpack.c.l.b16 %v1809
          %v1842 = vunpack.c.h.b16 %v1809
          %v1843 = vunpack.c.l.b16 %v1810
          %v1844 = vunpack.c.h.b16 %v1810
          %v1845 = vunpack.c.l.b16 %v1811
          %v1846 = vunpack.c.h.b16 %v1811
          %v1847 = vunpack.c.l.b16 %v1812
          %v1848 = vunpack.c.h.b16 %v1812
          %v1849 = vunpack.c.l.b16 %v1813
          %v1850 = vunpack.c.h.b16 %v1813
          %v1851 = vunpack.c.l.b16 %v1814
          %v1852 = vunpack.c.h.b16 %v1814
          %v1853 = vunpack.c.l.b16 %v1815
          %v1854 = vunpack.c.h.b16 %v1815
          %v1855 = vunpack.c.l.b16 %v1816
          %v1856 = vunpack.c.h.b16 %v1816
          %v1857 = vunpack.c.l.b16 %v1817
          %v1858 = vunpack.c.h.b16 %v1817
          %v1859 = vunpack.c.l.b16 %v1818
          %v1860 = vunpack.c.h.b16 %v1818
          %v1861 = vunpack.c.l.b16 %v1819
          %v1862 = vunpack.c.h.b16 %v1819
          %v1863 = vunpack.c.l.b16 %v1820
          %v1864 = vunpack.c.h.b16 %v1820
          %v1865 = vunpack.c.l.b16 %v1821
          %v1866 = vunpack.c.h.b16 %v1821
          %v1867 = vunpack.c.l.b16 %v1822
          %v1868 = vunpack.c.h.b16 %v1822
          %v1869 = vunpack.c.l.b16 %v1823
          %v1870 = vunpack.c.h.b16 %v1823
          %v1871 = vunpack.c.l.b16 %v1824
          %v1872 = vunpack.c.h.b16 %v1824
          %v1873 = vpack.c.b16 %v1841, %v1841
          %v1874 = vpack.c.b16 %v1842, %v1842
          %v1875 = vpack.c.b16 %v1843, %v1843
          %v1876 = vpack.c.b16 %v1844, %v1844
          %v1877 = vpack.c.b16 %v1845, %v1845
          %v1878 = vpack.c.b16 %v1846, %v1846
          %v1879 = vpack.c.b16 %v1847, %v1847
          %v1880 = vpack.c.b16 %v1848, %v1848
          %v1881 = vpack.c.b16 %v1849, %v1849
          %v1882 = vpack.c.b16 %v1850, %v1850
          %v1883 = vpack.c.b16 %v1851, %v1851
          %v1884 = vpack.c.b16 %v1852, %v1852
          %v1885 = vpack.c.b16 %v1853, %v1853
          %v1886 = vpack.c.b16 %v1854, %v1854
          %v1887 = vpack.c.b16 %v1855, %v1855
          %v1888 = vpack.c.b16 %v1856, %v1856
          %v1889 = vpack.c.b16 %v1857, %v1857
          %v1890 = vpack.c.b16 %v1858, %v1858
          %v1891 = vpack.c.b16 %v1859, %v1859
          %v1892 = vpack.c.b16 %v1860, %v1860
          %v1893 = vpack.c.b16 %v1861, %v1861
          %v1894 = vpack.c.b16 %v1862, %v1862
          %v1895 = vpack.c.b16 %v1863, %v1863
          %v1896 = vpack.c.b16 %v1864, %v1864
          %v1897 = vpack.c.b16 %v1865, %v1865
          %v1898 = vpack.c.b16 %v1866, %v1866
          %v1899 = vpack.c.b16 %v1867, %v1867
          %v1900 = vpack.c.b16 %v1868, %v1868
          %v1901 = vpack.c.b16 %v1869, %v1869
          %v1902 = vpack.c.b16 %v1870, %v1870
          %v1903 = vpack.c.b16 %v1871, %v1871
          %v1904 = vpack.c.b16 %v1872, %v1872
          %1937 = vst [vmem:[%s345] sm:$0xf] %v1873
          %1938 = vst [vmem:[%s345 + $0x4] sm:$0xf] %v1874
          %1939 = vst [vmem:[%s345 + $0x8] sm:$0xf] %v1875
          %1940 = vst [vmem:[%s345 + $0xc] sm:$0xf] %v1876
          %1941 = vst [vmem:[%s345 + $0x10] sm:$0xf] %v1877
          %1942 = vst [vmem:[%s345 + $0x14] sm:$0xf] %v1878
          %1943 = vst [vmem:[%s345 + $0x18] sm:$0xf] %v1879
          %1944 = vst [vmem:[%s345 + $0x1c] sm:$0xf] %v1880
          %1945 = vst [vmem:[%s345 + $0x20] sm:$0xf] %v1881
          %1946 = vst [vmem:[%s345 + $0x24] sm:$0xf] %v1882
          %1947 = vst [vmem:[%s345 + $0x28] sm:$0xf] %v1883
          %1948 = vst [vmem:[%s345 + $0x2c] sm:$0xf] %v1884
          %1949 = vst [vmem:[%s345 + $0x30] sm:$0xf] %v1885
          %1950 = vst [vmem:[%s345 + $0x34] sm:$0xf] %v1886
          %1951 = vst [vmem:[%s345 + $0x38] sm:$0xf] %v1887
          %1952 = vst [vmem:[%s345 + $0x3c] sm:$0xf] %v1888
          %1953 = vst [vmem:[%s345 + $0x40] sm:$0xf] %v1889
          %1954 = vst [vmem:[%s345 + $0x44] sm:$0xf] %v1890
          %1955 = vst [vmem:[%s345 + $0x48] sm:$0xf] %v1891
          %1956 = vst [vmem:[%s345 + $0x4c] sm:$0xf] %v1892
          %1957 = vst [vmem:[%s345 + $0x50] sm:$0xf] %v1893
          %1958 = vst [vmem:[%s345 + $0x54] sm:$0xf] %v1894
          %1959 = vst [vmem:[%s345 + $0x58] sm:$0xf] %v1895
          %1960 = vst [vmem:[%s345 + $0x5c] sm:$0xf] %v1896
          %1961 = vst [vmem:[%s345 + $0x60] sm:$0xf] %v1897
          %1962 = vst [vmem:[%s345 + $0x64] sm:$0xf] %v1898
          %1963 = vst [vmem:[%s345 + $0x68] sm:$0xf] %v1899
          %1964 = vst [vmem:[%s345 + $0x6c] sm:$0xf] %v1900
          %1965 = vst [vmem:[%s345 + $0x70] sm:$0xf] %v1901
          %1966 = vst [vmem:[%s345 + $0x74] sm:$0xf] %v1902
          %1967 = vst [vmem:[%s345 + $0x78] sm:$0xf] %v1903
          %1968 = vst [vmem:[%s345 + $0x7c] sm:$0xf] %v1904
        $region60: #{tpu_custom_call.1} parent=39 // pred_fallthru
          _
        %s1969 = sand.u32 %s170, 1
        %s1970 = scalar_lea.sflag [#allocation5], %s1969
        %s1971 = sand.u32 %s170, 1
        %s1972 = smul.addr %s1971, 128
        %s1973 = scalar_lea.vmem [#allocation9], %s1972
        // Predicated region
        $region61: #{tpu_custom_call.1} parent=39 // pred_check
          %p1974 = pneg %p180
        $region62: #{tpu_custom_call.1} parent=39 // pred_check_branch
          %1976 = sbr.rel (%p1974) target = $region64
        $region63: #{tpu_custom_call.1} parent=39 // pred_region
          %s1977 = smul.u32 32, %s29
          %s1979 = ssub.s32 2048, 2048
          %1980 = vsyncadd %s1970, %s1979
          %s1981 = smul.addr %s1977, 64
          %s1982 = scalar_lea.hbm %s5, %s1981
          %s1983 = sshll.u32 %s1973, 4
          %s1984 = int_to_ptr.vmem [resolvable:$true] %s1983
          %1989 = dma.vmem_to_hbm [thread:$0]  %s1984, 2048, %s1982, %s1970, 64, 64, 4
        $region64: #{tpu_custom_call.1} parent=39 // pred_fallthru
          _
      $region40: #{tpu_custom_call.1} parent=5 // pred_fallthru
        _
      %p1990 = scmp.le.s32.totalorder 2, %s20
      // Predicated region
      $region65: #{tpu_custom_call.1} parent=5 // pred_check
        %p1991 = pneg %p1990
      $region66: #{tpu_custom_call.1} parent=5 // pred_check_branch
        %1993 = sbr.rel (%p1991) target = $region68
      $region67: #{tpu_custom_call.1} parent=5 // pred_region
        %s1994 = ssub.s32 %s20, 2
        // Predicated region
        $region69: #{tpu_custom_call.1} parent=67 // pred_check
          %p1995 = pneg %p186
        $region70: #{tpu_custom_call.1} parent=67 // pred_check_branch
          %1997 = sbr.rel (%p1995) target = $region72
        $region71: #{tpu_custom_call.1} parent=67 // pred_region
          %s1998 = sand.u32 %s171, 1
          %s1999 = scalar_lea.sflag [#allocation5], %s1998
          %s2000 = sand.u32 %s171, 1
          %s2001 = smul.addr %s2000, 128
          %s2002 = scalar_lea.vmem [#allocation9], %s2001
          %2003 = dma.done %s1999, 2048
        $region72: #{tpu_custom_call.1} parent=67 // pred_fallthru
          _
      $region68: #{tpu_custom_call.1} parent=5 // pred_fallthru
        _
    $region6: #{tpu_custom_call.1} parent=1 // loop_footer
      %s24 = sadd.s32 1, %s20
    $region7: #{tpu_custom_call.1} parent=1 // loop_footer_branch
      %19 = sbr.rel target = $region3
    $region8: #{tpu_custom_call.1} parent=1 // loop_exit
      _
    %2004 = vsyncpa [#allocation4], 1
    %s2005 = scalar_lea.sflag [#allocation4], 1
    %2006 = vsyncpa %s2005, 1
    %2007 = vsyncpa [#allocation7], 1
    %s2008 = scalar_lea.sflag [#allocation7], 1
    %2009 = vsyncpa %s2008, 1
    %2010 = vsyncpa [#allocation5], 1
    %s2011 = scalar_lea.sflag [#allocation5], 1
    %2012 = vsyncpa %s2011, 1

</llo_original>
